<compile_context>
chip_gen: v6e
topology: v6e:2x2x1
jax: 0.10.0
libtpu: 0.0.40
codegen_flags: <defaults>
</compile_context>

<pallas_src>
import functools

import jax
import jax.numpy as jnp
from jax import lax
from jax.experimental import pallas as pl
from jax.experimental.pallas import tpu as pltpu


def _round_up(x, m):
    return (x + m - 1) // m * m


def _pick_time_block(seq_len, max_blk=16):
    # Largest divisor of seq_len that is <= max_blk (keeps the grid exact).
    for cand in range(min(seq_len, max_blk), 0, -1):
        if seq_len % cand == 0:
            return cand
    return 1


def rnn_kernel(xz_ref, h0_ref, whhT_ref, wdT_ref, bd_ref,
               out_ref, state_ref, h_scratch, hblk_scratch, *, t_blk, b_pad):
    i = pl.program_id(0)

    # Initialize carried hidden state from the provided initial state.
    @pl.when(i == 0)
    def _():
        h_scratch[...] = h0_ref[...]

    # Serial recurrence over the T_BLK steps of this block.
    # xz already holds  x_t @ W_ih^T + (b_ih + b_hh)  (hoisted out of the loop).
    def step(s, carry):
        h_prev = h_scratch[...]                               # (B_pad, H_pad)
        pre = xz_ref[s] + jnp.dot(h_prev, whhT_ref[...],
                                  preferred_element_type=jnp.float32)
        h_t = jnp.tanh(pre)
        h_scratch[...] = h_t
        hblk_scratch[s] = h_t
        return carry

    lax.fori_loop(0, t_blk, step, 0, unroll=True)

    # Fused dense projection for the whole block: (T_BLK*B_pad, H) x (H, V_pad).
    hid = hblk_scratch[...].reshape(t_blk * b_pad, -1)
    out_ref[...] = (jnp.dot(hid, wdT_ref[...],
                            preferred_element_type=jnp.float32) + bd_ref[...])

    # Final state written once at the last block (output block is resident).
    @pl.when(i == pl.num_programs(0) - 1)
    def _():
        state_ref[...] = h_scratch[...]


def rnn_model_forward(inputs, h0, params, vocab_size):
    """inputs: (batch, seq_len) int32 token ids; h0: (1, batch, hidden).
    Returns (output, state) with output: (seq_len*batch, vocab_size)."""
    w_ih, w_hh, b_ih, b_hh, w_d, b_d = params
    batch, seq_len = inputs.shape
    hidden = w_hh.shape[0]

    b_pad = _round_up(batch, 8)          # sublane alignment
    h_pad = _round_up(hidden, 128)       # lane alignment
    v_pad = _round_up(vocab_size, 128)   # lane-dense output
    t_blk = _pick_time_block(seq_len)
    n_blk = seq_len // t_blk

    f32 = jnp.float32
    # One-time wrapper-side layout plumbing: pre-transposed + zero-padded weights.
    w_ihT = jnp.zeros((vocab_size, h_pad), f32).at[:, :hidden].set(w_ih.T)
    w_hhT = jnp.zeros((h_pad, h_pad), f32).at[:hidden, :hidden].set(w_hh.T)
    w_dT = jnp.zeros((h_pad, v_pad), f32).at[:hidden, :vocab_size].set(w_d.T)
    b_rec = jnp.zeros((h_pad,), f32).at[:hidden].set(b_ih + b_hh)
    b_d_p = jnp.zeros((1, v_pad), f32).at[0, :vocab_size].set(b_d)

    # Hoisted input projection (time-major, like nn.RNN with batch_first=False):
    # one_hot(x_t) @ W_ih^T is a row gather of W_ih^T; biases pre-summed and folded.
    xz = jnp.take(w_ihT, inputs.T, axis=0) + b_rec            # (T, B, H_pad)
    xz = jnp.zeros((seq_len, b_pad, h_pad), f32).at[:, :batch, :].set(xz)

    h0_p = jnp.zeros((b_pad, h_pad), f32).at[:batch, :hidden].set(h0[0])

    flops = 2 * seq_len * b_pad * h_pad * (h_pad + v_pad)
    transcendentals = seq_len * b_pad * h_pad
    bytes_accessed = 4 * (xz.size + seq_len * b_pad * v_pad
                          + h_pad * h_pad + h_pad * v_pad + v_pad
                          + 2 * b_pad * h_pad)
    cost = pl.CostEstimate(flops=flops, transcendentals=transcendentals,
                           bytes_accessed=bytes_accessed)

    kernel = functools.partial(rnn_kernel, t_blk=t_blk, b_pad=b_pad)

    logits_p, state_p = pl.pallas_call(
        kernel,
        out_shape=(
            jax.ShapeDtypeStruct((seq_len * b_pad, v_pad), f32),
            jax.ShapeDtypeStruct((b_pad, h_pad), f32),
        ),
        grid_spec=pltpu.PrefetchScalarGridSpec(
            num_scalar_prefetch=0,
            grid=(n_blk,),
            in_specs=[
                pl.BlockSpec((t_blk, b_pad, h_pad), lambda i: (i, 0, 0)),  # xz block
                pl.BlockSpec((b_pad, h_pad), lambda i: (0, 0)),            # h0
                pl.BlockSpec((h_pad, h_pad), lambda i: (0, 0)),            # W_hh^T
                pl.BlockSpec((h_pad, v_pad), lambda i: (0, 0)),            # W_d^T
                pl.BlockSpec((1, v_pad), lambda i: (0, 0)),                # b_d
            ],
            out_specs=[
                pl.BlockSpec((t_blk * b_pad, v_pad), lambda i: (i, 0)),    # logits
                pl.BlockSpec((b_pad, h_pad), lambda i: (0, 0)),            # final state
            ],
            scratch_shapes=[
                pltpu.VMEM((b_pad, h_pad), f32),          # carried hidden state
                pltpu.VMEM((t_blk, b_pad, h_pad), f32),   # per-block hiddens
            ],
        ),
        compiler_params=pltpu.CompilerParams(
            dimension_semantics=("arbitrary",)),   # time axis is inherently serial
        cost_estimate=cost,
    )(xz, h0_p, w_hhT, w_dT, b_d_p)

    # Strip padding; flatten time-major exactly like hiddens.view(-1, H) @ W_d^T + b_d.
    output = (logits_p.reshape(seq_len, b_pad, v_pad)[:, :batch, :vocab_size]
              .reshape(seq_len * batch, vocab_size))
    state = state_p[:batch, :hidden][None]
    return output, state


def reference_forward(inputs, h0, params, vocab_size):
    """Pure-JAX reference mirroring the PyTorch forward."""
    w_ih, w_hh, b_ih, b_hh, w_d, b_d = params
    x = jax.nn.one_hot(inputs.T, vocab_size, dtype=jnp.float32)  # (T, B, V)
    h = h0[0]
    hs = []
    for t in range(x.shape[0]):
        h = jnp.tanh(x[t] @ w_ih.T + b_ih + h @ w_hh.T + b_hh)
        hs.append(h)
    hiddens = jnp.stack(hs).reshape(-1, h.shape[-1])
    out = hiddens @ w_d.T + b_d
    return out, h[None]


if __name__ == "__main__":
    batch, seq_len, vocab_size, hidden = 2, 8, 16, 32

    key = jax.random.PRNGKey(0)
    ks = jax.random.split(key, 8)
    scale = 1.0 / jnp.sqrt(hidden)
    w_ih = jax.random.uniform(ks[0], (hidden, vocab_size), jnp.float32, -scale, scale)
    w_hh = jax.random.uniform(ks[1], (hidden, hidden), jnp.float32, -scale, scale)
    b_ih = jax.random.uniform(ks[2], (hidden,), jnp.float32, -scale, scale)
    b_hh = jax.random.uniform(ks[3], (hidden,), jnp.float32, -scale, scale)
    w_d = jax.random.uniform(ks[4], (vocab_size, hidden), jnp.float32, -scale, scale)
    b_d = jax.random.uniform(ks[5], (vocab_size,), jnp.float32, -scale, scale)
    params = (w_ih, w_hh, b_ih, b_hh, w_d, b_d)

    inputs = jax.random.randint(ks[6], (batch, seq_len), 0, vocab_size, jnp.int32)
    h0 = jnp.zeros((1, batch, hidden), jnp.float32)

    out, state = rnn_model_forward(inputs, h0, params, vocab_size)
    out = jax.block_until_ready(out)
    state = jax.block_until_ready(state)

    ref_out, ref_state = reference_forward(inputs, h0, params, vocab_size)
    assert out.shape == (seq_len * batch, vocab_size)
    assert state.shape == (1, batch, hidden)
    assert jnp.allclose(out, ref_out, atol=1e-5, rtol=1e-5)
    assert jnp.allclose(state, ref_state, atol=1e-5, rtol=1e-5)

    print("KERNEL_OK")
</pallas_src>

<mosaic_0001>
module attributes {stable_mosaic.version = 11 : i64} {
  func.func @rnn_kernel(%arg0: i32, %arg1: memref<8x8x128xf32, #tpu.memory_space<vmem>>, %arg2: memref<8x128xf32, #tpu.memory_space<vmem>>, %arg3: memref<128x128xf32, #tpu.memory_space<vmem>>, %arg4: memref<128x128xf32, #tpu.memory_space<vmem>>, %arg5: memref<1x128xf32, #tpu.memory_space<vmem>>, %arg6: memref<64x128xf32, #tpu.memory_space<vmem>>, %arg7: memref<8x128xf32, #tpu.memory_space<vmem>>, %arg8: memref<8x128xf32, #tpu.memory_space<vmem>>, %arg9: memref<8x8x128xf32, #tpu.memory_space<vmem>>) attributes {dimension_semantics = [#tpu.dimension_semantics<arbitrary>], iteration_bounds = array<i64: 1>, scalar_prefetch = 0 : i64, scratch_operands = 2 : i64, tpu.core_type = #tpu.core_type<tc>, window_params = [{transform_indices = @transform_0, window_bounds = array<i64: 8, 8, 128>}, {pipeline_mode = #tpu.pipeline_mode<synchronous>, transform_indices = @transform_1, window_bounds = array<i64: 8, 128>}, {pipeline_mode = #tpu.pipeline_mode<synchronous>, transform_indices = @transform_2, window_bounds = array<i64: 128, 128>}, {pipeline_mode = #tpu.pipeline_mode<synchronous>, transform_indices = @transform_3, window_bounds = array<i64: 128, 128>}, {pipeline_mode = #tpu.pipeline_mode<synchronous>, transform_indices = @transform_4, window_bounds = array<i64: 1, 128>}, {transform_indices = @transform_5, window_bounds = array<i64: 64, 128>}, {pipeline_mode = #tpu.pipeline_mode<synchronous>, transform_indices = @transform_6, window_bounds = array<i64: 8, 128>}]} {
    %c0_i32 = arith.constant 0 : i32
    %0 = arith.cmpi eq, %arg0, %c0_i32 : i32
    %1 = arith.extui %0 : i1 to i32
    %c0_i32_0 = arith.constant 0 : i32
    %2 = arith.cmpi ne, %1, %c0_i32_0 : i32
    scf.if %2 {
      %c0_100 = arith.constant 0 : index
      %c0_101 = arith.constant 0 : index
      %118 = vector.load %arg2[%c0_100, %c0_101] : memref<8x128xf32, #tpu.memory_space<vmem>>, vector<8x128xf32>
      %c0_102 = arith.constant 0 : index
      %c0_103 = arith.constant 0 : index
      %119 = vector.load %arg8[%c0_102, %c0_103] : memref<8x128xf32, #tpu.memory_space<vmem>>, vector<8x128xf32>
      tpu.vector_store %arg8[%c0_102, %c0_103], %118 {strides = array<i32>} : memref<8x128xf32, #tpu.memory_space<vmem>>, vector<8x128xf32>,
    } else {
    }
    %c0_i32_1 = arith.constant 0 : i32
    %c0 = arith.constant 0 : index
    %c0_2 = arith.constant 0 : index
    %3 = vector.load %arg8[%c0, %c0_2] : memref<8x128xf32, #tpu.memory_space<vmem>>, vector<8x128xf32>
    %4 = arith.index_cast %c0_i32_1 : i32 to index
    %c0_3 = arith.constant 0 : index
    %c0_4 = arith.constant 0 : index
    %5 = vector.load %arg1[%4, %c0_3, %c0_4] : memref<8x8x128xf32, #tpu.memory_space<vmem>>, vector<1x8x128xf32>
    %6 = vector.shape_cast %5 : vector<1x8x128xf32> to vector<8x128xf32>
    %c0_5 = arith.constant 0 : index
    %c0_6 = arith.constant 0 : index
    %7 = vector.load %arg3[%c0_5, %c0_6] : memref<128x128xf32, #tpu.memory_space<vmem>>, vector<128x128xf32>
    %cst = arith.constant dense<0.000000e+00> : vector<8x128xf32>
    %8 = tpu.matmul %3, %7, %cst {dimension_numbers = #tpu.dot_dimension_numbers<[1], [0], [0], [1], [0, 0, 1, 1], [], []>} : vector<8x128xf32>, vector<128x128xf32>, vector<8x128xf32> -> vector<8x128xf32>
    %9 = arith.addf %6, %8 : vector<8x128xf32>
    %10 = math.tanh %9 : vector<8x128xf32>
    %c0_7 = arith.constant 0 : index
    %c0_8 = arith.constant 0 : index
    %11 = vector.load %arg8[%c0_7, %c0_8] : memref<8x128xf32, #tpu.memory_space<vmem>>, vector<8x128xf32>
    tpu.vector_store %arg8[%c0_7, %c0_8], %10 {strides = array<i32>} : memref<8x128xf32, #tpu.memory_space<vmem>>, vector<8x128xf32>,
    %12 = arith.index_cast %c0_i32_1 : i32 to index
    %c0_9 = arith.constant 0 : index
    %c0_10 = arith.constant 0 : index
    %13 = vector.load %arg9[%12, %c0_9, %c0_10] : memref<8x8x128xf32, #tpu.memory_space<vmem>>, vector<1x8x128xf32>
    %14 = vector.shape_cast %13 : vector<1x8x128xf32> to vector<8x128xf32>
    %15 = vector.shape_cast %10 : vector<8x128xf32> to vector<1x8x128xf32>
    tpu.vector_store %arg9[%12, %c0_9, %c0_10], %15 {strides = array<i32>} : memref<8x8x128xf32, #tpu.memory_space<vmem>>, vector<1x8x128xf32>,
    %c1_i32 = arith.constant 1 : i32
    %c0_11 = arith.constant 0 : index
    %c0_12 = arith.constant 0 : index
    %16 = vector.load %arg8[%c0_11, %c0_12] : memref<8x128xf32, #tpu.memory_space<vmem>>, vector<8x128xf32>
    %17 = arith.index_cast %c1_i32 : i32 to index
    %c0_13 = arith.constant 0 : index
    %c0_14 = arith.constant 0 : index
    %18 = vector.load %arg1[%17, %c0_13, %c0_14] : memref<8x8x128xf32, #tpu.memory_space<vmem>>, vector<1x8x128xf32>
    %19 = vector.shape_cast %18 : vector<1x8x128xf32> to vector<8x128xf32>
    %c0_15 = arith.constant 0 : index
    %c0_16 = arith.constant 0 : index
    %20 = vector.load %arg3[%c0_15, %c0_16] : memref<128x128xf32, #tpu.memory_space<vmem>>, vector<128x128xf32>
    %cst_17 = arith.constant dense<0.000000e+00> : vector<8x128xf32>
    %21 = tpu.matmul %16, %20, %cst_17 {dimension_numbers = #tpu.dot_dimension_numbers<[1], [0], [0], [1], [0, 0, 1, 1], [], []>} : vector<8x128xf32>, vector<128x128xf32>, vector<8x128xf32> -> vector<8x128xf32>
    %22 = arith.addf %19, %21 : vector<8x128xf32>
    %23 = math.tanh %22 : vector<8x128xf32>
    %c0_18 = arith.constant 0 : index
    %c0_19 = arith.constant 0 : index
    %24 = vector.load %arg8[%c0_18, %c0_19] : memref<8x128xf32, #tpu.memory_space<vmem>>, vector<8x128xf32>
    tpu.vector_store %arg8[%c0_18, %c0_19], %23 {strides = array<i32>} : memref<8x128xf32, #tpu.memory_space<vmem>>, vector<8x128xf32>,
    %25 = arith.index_cast %c1_i32 : i32 to index
    %c0_20 = arith.constant 0 : index
    %c0_21 = arith.constant 0 : index
    %26 = vector.load %arg9[%25, %c0_20, %c0_21] : memref<8x8x128xf32, #tpu.memory_space<vmem>>, vector<1x8x128xf32>
    %27 = vector.shape_cast %26 : vector<1x8x128xf32> to vector<8x128xf32>
    %28 = vector.shape_cast %23 : vector<8x128xf32> to vector<1x8x128xf32>
    tpu.vector_store %arg9[%25, %c0_20, %c0_21], %28 {strides = array<i32>} : memref<8x8x128xf32, #tpu.memory_space<vmem>>, vector<1x8x128xf32>,
    %c2_i32 = arith.constant 2 : i32
    %c0_22 = arith.constant 0 : index
    %c0_23 = arith.constant 0 : index
    %29 = vector.load %arg8[%c0_22, %c0_23] : memref<8x128xf32, #tpu.memory_space<vmem>>, vector<8x128xf32>
    %30 = arith.index_cast %c2_i32 : i32 to index
    %c0_24 = arith.constant 0 : index
    %c0_25 = arith.constant 0 : index
    %31 = vector.load %arg1[%30, %c0_24, %c0_25] : memref<8x8x128xf32, #tpu.memory_space<vmem>>, vector<1x8x128xf32>
    %32 = vector.shape_cast %31 : vector<1x8x128xf32> to vector<8x128xf32>
    %c0_26 = arith.constant 0 : index
    %c0_27 = arith.constant 0 : index
    %33 = vector.load %arg3[%c0_26, %c0_27] : memref<128x128xf32, #tpu.memory_space<vmem>>, vector<128x128xf32>
    %cst_28 = arith.constant dense<0.000000e+00> : vector<8x128xf32>
    %34 = tpu.matmul %29, %33, %cst_28 {dimension_numbers = #tpu.dot_dimension_numbers<[1], [0], [0], [1], [0, 0, 1, 1], [], []>} : vector<8x128xf32>, vector<128x128xf32>, vector<8x128xf32> -> vector<8x128xf32>
    %35 = arith.addf %32, %34 : vector<8x128xf32>
    %36 = math.tanh %35 : vector<8x128xf32>
    %c0_29 = arith.constant 0 : index
    %c0_30 = arith.constant 0 : index
    %37 = vector.load %arg8[%c0_29, %c0_30] : memref<8x128xf32, #tpu.memory_space<vmem>>, vector<8x128xf32>
    tpu.vector_store %arg8[%c0_29, %c0_30], %36 {strides = array<i32>} : memref<8x128xf32, #tpu.memory_space<vmem>>, vector<8x128xf32>,
    %38 = arith.index_cast %c2_i32 : i32 to index
    %c0_31 = arith.constant 0 : index
    %c0_32 = arith.constant 0 : index
    %39 = vector.load %arg9[%38, %c0_31, %c0_32] : memref<8x8x128xf32, #tpu.memory_space<vmem>>, vector<1x8x128xf32>
    %40 = vector.shape_cast %39 : vector<1x8x128xf32> to vector<8x128xf32>
    %41 = vector.shape_cast %36 : vector<8x128xf32> to vector<1x8x128xf32>
    tpu.vector_store %arg9[%38, %c0_31, %c0_32], %41 {strides = array<i32>} : memref<8x8x128xf32, #tpu.memory_space<vmem>>, vector<1x8x128xf32>,
    %c3_i32 = arith.constant 3 : i32
    %c0_33 = arith.constant 0 : index
    %c0_34 = arith.constant 0 : index
    %42 = vector.load %arg8[%c0_33, %c0_34] : memref<8x128xf32, #tpu.memory_space<vmem>>, vector<8x128xf32>
    %43 = arith.index_cast %c3_i32 : i32 to index
    %c0_35 = arith.constant 0 : index
    %c0_36 = arith.constant 0 : index
    %44 = vector.load %arg1[%43, %c0_35, %c0_36] : memref<8x8x128xf32, #tpu.memory_space<vmem>>, vector<1x8x128xf32>
    %45 = vector.shape_cast %44 : vector<1x8x128xf32> to vector<8x128xf32>
    %c0_37 = arith.constant 0 : index
    %c0_38 = arith.constant 0 : index
    %46 = vector.load %arg3[%c0_37, %c0_38] : memref<128x128xf32, #tpu.memory_space<vmem>>, vector<128x128xf32>
    %cst_39 = arith.constant dense<0.000000e+00> : vector<8x128xf32>
    %47 = tpu.matmul %42, %46, %cst_39 {dimension_numbers = #tpu.dot_dimension_numbers<[1], [0], [0], [1], [0, 0, 1, 1], [], []>} : vector<8x128xf32>, vector<128x128xf32>, vector<8x128xf32> -> vector<8x128xf32>
    %48 = arith.addf %45, %47 : vector<8x128xf32>
    %49 = math.tanh %48 : vector<8x128xf32>
    %c0_40 = arith.constant 0 : index
    %c0_41 = arith.constant 0 : index
    %50 = vector.load %arg8[%c0_40, %c0_41] : memref<8x128xf32, #tpu.memory_space<vmem>>, vector<8x128xf32>
    tpu.vector_store %arg8[%c0_40, %c0_41], %49 {strides = array<i32>} : memref<8x128xf32, #tpu.memory_space<vmem>>, vector<8x128xf32>,
    %51 = arith.index_cast %c3_i32 : i32 to index
    %c0_42 = arith.constant 0 : index
    %c0_43 = arith.constant 0 : index
    %52 = vector.load %arg9[%51, %c0_42, %c0_43] : memref<8x8x128xf32, #tpu.memory_space<vmem>>, vector<1x8x128xf32>
    %53 = vector.shape_cast %52 : vector<1x8x128xf32> to vector<8x128xf32>
    %54 = vector.shape_cast %49 : vector<8x128xf32> to vector<1x8x128xf32>
    tpu.vector_store %arg9[%51, %c0_42, %c0_43], %54 {strides = array<i32>} : memref<8x8x128xf32, #tpu.memory_space<vmem>>, vector<1x8x128xf32>,
    %c4_i32 = arith.constant 4 : i32
    %c0_44 = arith.constant 0 : index
    %c0_45 = arith.constant 0 : index
    %55 = vector.load %arg8[%c0_44, %c0_45] : memref<8x128xf32, #tpu.memory_space<vmem>>, vector<8x128xf32>
    %56 = arith.index_cast %c4_i32 : i32 to index
    %c0_46 = arith.constant 0 : index
    %c0_47 = arith.constant 0 : index
    %57 = vector.load %arg1[%56, %c0_46, %c0_47] : memref<8x8x128xf32, #tpu.memory_space<vmem>>, vector<1x8x128xf32>
    %58 = vector.shape_cast %57 : vector<1x8x128xf32> to vector<8x128xf32>
    %c0_48 = arith.constant 0 : index
    %c0_49 = arith.constant 0 : index
    %59 = vector.load %arg3[%c0_48, %c0_49] : memref<128x128xf32, #tpu.memory_space<vmem>>, vector<128x128xf32>
    %cst_50 = arith.constant dense<0.000000e+00> : vector<8x128xf32>
    %60 = tpu.matmul %55, %59, %cst_50 {dimension_numbers = #tpu.dot_dimension_numbers<[1], [0], [0], [1], [0, 0, 1, 1], [], []>} : vector<8x128xf32>, vector<128x128xf32>, vector<8x128xf32> -> vector<8x128xf32>
    %61 = arith.addf %58, %60 : vector<8x128xf32>
    %62 = math.tanh %61 : vector<8x128xf32>
    %c0_51 = arith.constant 0 : index
    %c0_52 = arith.constant 0 : index
    %63 = vector.load %arg8[%c0_51, %c0_52] : memref<8x128xf32, #tpu.memory_space<vmem>>, vector<8x128xf32>
    tpu.vector_store %arg8[%c0_51, %c0_52], %62 {strides = array<i32>} : memref<8x128xf32, #tpu.memory_space<vmem>>, vector<8x128xf32>,
    %64 = arith.index_cast %c4_i32 : i32 to index
    %c0_53 = arith.constant 0 : index
    %c0_54 = arith.constant 0 : index
    %65 = vector.load %arg9[%64, %c0_53, %c0_54] : memref<8x8x128xf32, #tpu.memory_space<vmem>>, vector<1x8x128xf32>
    %66 = vector.shape_cast %65 : vector<1x8x128xf32> to vector<8x128xf32>
    %67 = vector.shape_cast %62 : vector<8x128xf32> to vector<1x8x128xf32>
    tpu.vector_store %arg9[%64, %c0_53, %c0_54], %67 {strides = array<i32>} : memref<8x8x128xf32, #tpu.memory_space<vmem>>, vector<1x8x128xf32>,
    %c5_i32 = arith.constant 5 : i32
    %c0_55 = arith.constant 0 : index
    %c0_56 = arith.constant 0 : index
    %68 = vector.load %arg8[%c0_55, %c0_56] : memref<8x128xf32, #tpu.memory_space<vmem>>, vector<8x128xf32>
    %69 = arith.index_cast %c5_i32 : i32 to index
    %c0_57 = arith.constant 0 : index
    %c0_58 = arith.constant 0 : index
    %70 = vector.load %arg1[%69, %c0_57, %c0_58] : memref<8x8x128xf32, #tpu.memory_space<vmem>>, vector<1x8x128xf32>
    %71 = vector.shape_cast %70 : vector<1x8x128xf32> to vector<8x128xf32>
    %c0_59 = arith.constant 0 : index
    %c0_60 = arith.constant 0 : index
    %72 = vector.load %arg3[%c0_59, %c0_60] : memref<128x128xf32, #tpu.memory_space<vmem>>, vector<128x128xf32>
    %cst_61 = arith.constant dense<0.000000e+00> : vector<8x128xf32>
    %73 = tpu.matmul %68, %72, %cst_61 {dimension_numbers = #tpu.dot_dimension_numbers<[1], [0], [0], [1], [0, 0, 1, 1], [], []>} : vector<8x128xf32>, vector<128x128xf32>, vector<8x128xf32> -> vector<8x128xf32>
    %74 = arith.addf %71, %73 : vector<8x128xf32>
    %75 = math.tanh %74 : vector<8x128xf32>
    %c0_62 = arith.constant 0 : index
    %c0_63 = arith.constant 0 : index
    %76 = vector.load %arg8[%c0_62, %c0_63] : memref<8x128xf32, #tpu.memory_space<vmem>>, vector<8x128xf32>
    tpu.vector_store %arg8[%c0_62, %c0_63], %75 {strides = array<i32>} : memref<8x128xf32, #tpu.memory_space<vmem>>, vector<8x128xf32>,
    %77 = arith.index_cast %c5_i32 : i32 to index
    %c0_64 = arith.constant 0 : index
    %c0_65 = arith.constant 0 : index
    %78 = vector.load %arg9[%77, %c0_64, %c0_65] : memref<8x8x128xf32, #tpu.memory_space<vmem>>, vector<1x8x128xf32>
    %79 = vector.shape_cast %78 : vector<1x8x128xf32> to vector<8x128xf32>
    %80 = vector.shape_cast %75 : vector<8x128xf32> to vector<1x8x128xf32>
    tpu.vector_store %arg9[%77, %c0_64, %c0_65], %80 {strides = array<i32>} : memref<8x8x128xf32, #tpu.memory_space<vmem>>, vector<1x8x128xf32>,
    %c6_i32 = arith.constant 6 : i32
    %c0_66 = arith.constant 0 : index
    %c0_67 = arith.constant 0 : index
    %81 = vector.load %arg8[%c0_66, %c0_67] : memref<8x128xf32, #tpu.memory_space<vmem>>, vector<8x128xf32>
    %82 = arith.index_cast %c6_i32 : i32 to index
    %c0_68 = arith.constant 0 : index
    %c0_69 = arith.constant 0 : index
    %83 = vector.load %arg1[%82, %c0_68, %c0_69] : memref<8x8x128xf32, #tpu.memory_space<vmem>>, vector<1x8x128xf32>
    %84 = vector.shape_cast %83 : vector<1x8x128xf32> to vector<8x128xf32>
    %c0_70 = arith.constant 0 : index
    %c0_71 = arith.constant 0 : index
    %85 = vector.load %arg3[%c0_70, %c0_71] : memref<128x128xf32, #tpu.memory_space<vmem>>, vector<128x128xf32>
    %cst_72 = arith.constant dense<0.000000e+00> : vector<8x128xf32>
    %86 = tpu.matmul %81, %85, %cst_72 {dimension_numbers = #tpu.dot_dimension_numbers<[1], [0], [0], [1], [0, 0, 1, 1], [], []>} : vector<8x128xf32>, vector<128x128xf32>, vector<8x128xf32> -> vector<8x128xf32>
    %87 = arith.addf %84, %86 : vector<8x128xf32>
    %88 = math.tanh %87 : vector<8x128xf32>
    %c0_73 = arith.constant 0 : index
    %c0_74 = arith.constant 0 : index
    %89 = vector.load %arg8[%c0_73, %c0_74] : memref<8x128xf32, #tpu.memory_space<vmem>>, vector<8x128xf32>
    tpu.vector_store %arg8[%c0_73, %c0_74], %88 {strides = array<i32>} : memref<8x128xf32, #tpu.memory_space<vmem>>, vector<8x128xf32>,
    %90 = arith.index_cast %c6_i32 : i32 to index
    %c0_75 = arith.constant 0 : index
    %c0_76 = arith.constant 0 : index
    %91 = vector.load %arg9[%90, %c0_75, %c0_76] : memref<8x8x128xf32, #tpu.memory_space<vmem>>, vector<1x8x128xf32>
    %92 = vector.shape_cast %91 : vector<1x8x128xf32> to vector<8x128xf32>
    %93 = vector.shape_cast %88 : vector<8x128xf32> to vector<1x8x128xf32>
    tpu.vector_store %arg9[%90, %c0_75, %c0_76], %93 {strides = array<i32>} : memref<8x8x128xf32, #tpu.memory_space<vmem>>, vector<1x8x128xf32>,
    %c7_i32 = arith.constant 7 : i32
    %c0_77 = arith.constant 0 : index
    %c0_78 = arith.constant 0 : index
    %94 = vector.load %arg8[%c0_77, %c0_78] : memref<8x128xf32, #tpu.memory_space<vmem>>, vector<8x128xf32>
    %95 = arith.index_cast %c7_i32 : i32 to index
    %c0_79 = arith.constant 0 : index
    %c0_80 = arith.constant 0 : index
    %96 = vector.load %arg1[%95, %c0_79, %c0_80] : memref<8x8x128xf32, #tpu.memory_space<vmem>>, vector<1x8x128xf32>
    %97 = vector.shape_cast %96 : vector<1x8x128xf32> to vector<8x128xf32>
    %c0_81 = arith.constant 0 : index
    %c0_82 = arith.constant 0 : index
    %98 = vector.load %arg3[%c0_81, %c0_82] : memref<128x128xf32, #tpu.memory_space<vmem>>, vector<128x128xf32>
    %cst_83 = arith.constant dense<0.000000e+00> : vector<8x128xf32>
    %99 = tpu.matmul %94, %98, %cst_83 {dimension_numbers = #tpu.dot_dimension_numbers<[1], [0], [0], [1], [0, 0, 1, 1], [], []>} : vector<8x128xf32>, vector<128x128xf32>, vector<8x128xf32> -> vector<8x128xf32>
    %100 = arith.addf %97, %99 : vector<8x128xf32>
    %101 = math.tanh %100 : vector<8x128xf32>
    %c0_84 = arith.constant 0 : index
    %c0_85 = arith.constant 0 : index
    %102 = vector.load %arg8[%c0_84, %c0_85] : memref<8x128xf32, #tpu.memory_space<vmem>>, vector<8x128xf32>
    tpu.vector_store %arg8[%c0_84, %c0_85], %101 {strides = array<i32>} : memref<8x128xf32, #tpu.memory_space<vmem>>, vector<8x128xf32>,
    %103 = arith.index_cast %c7_i32 : i32 to index
    %c0_86 = arith.constant 0 : index
    %c0_87 = arith.constant 0 : index
    %104 = vector.load %arg9[%103, %c0_86, %c0_87] : memref<8x8x128xf32, #tpu.memory_space<vmem>>, vector<1x8x128xf32>
    %105 = vector.shape_cast %104 : vector<1x8x128xf32> to vector<8x128xf32>
    %106 = vector.shape_cast %101 : vector<8x128xf32> to vector<1x8x128xf32>
    tpu.vector_store %arg9[%103, %c0_86, %c0_87], %106 {strides = array<i32>} : memref<8x8x128xf32, #tpu.memory_space<vmem>>, vector<1x8x128xf32>,
    %c8_i32 = arith.constant 8 : i32
    %c0_88 = arith.constant 0 : index
    %c0_89 = arith.constant 0 : index
    %c0_90 = arith.constant 0 : index
    %107 = vector.load %arg9[%c0_88, %c0_89, %c0_90] : memref<8x8x128xf32, #tpu.memory_space<vmem>>, vector<8x8x128xf32>
    %108 = vector.shape_cast %107 : vector<8x8x128xf32> to vector<64x128xf32>
    %c0_91 = arith.constant 0 : index
    %c0_92 = arith.constant 0 : index
    %109 = vector.load %arg4[%c0_91, %c0_92] : memref<128x128xf32, #tpu.memory_space<vmem>>, vector<128x128xf32>
    %cst_93 = arith.constant dense<0.000000e+00> : vector<64x128xf32>
    %110 = tpu.matmul %108, %109, %cst_93 {dimension_numbers = #tpu.dot_dimension_numbers<[1], [0], [0], [1], [0, 0, 1, 1], [], []>} : vector<64x128xf32>, vector<128x128xf32>, vector<64x128xf32> -> vector<64x128xf32>
    %c0_94 = arith.constant 0 : index
    %c0_95 = arith.constant 0 : index
    %111 = vector.load %arg5[%c0_94, %c0_95] : memref<1x128xf32, #tpu.memory_space<vmem>>, vector<1x128xf32>
    %112 = vector.broadcast %111 : vector<1x128xf32> to vector<64x128xf32>
    %113 = arith.addf %110, %112 : vector<64x128xf32>
    %c0_96 = arith.constant 0 : index
    %c0_97 = arith.constant 0 : index
    %114 = vector.load %arg6[%c0_96, %c0_97] : memref<64x128xf32, #tpu.memory_space<vmem>>, vector<64x128xf32>
    tpu.vector_store %arg6[%c0_96, %c0_97], %113 {strides = array<i32>} : memref<64x128xf32, #tpu.memory_space<vmem>>, vector<64x128xf32>,
    %c0_i32_98 = arith.constant 0 : i32
    %115 = arith.cmpi eq, %arg0, %c0_i32_98 : i32
    %116 = arith.extui %115 : i1 to i32
    %c0_i32_99 = arith.constant 0 : i32
    %117 = arith.cmpi ne, %116, %c0_i32_99 : i32
    scf.if %117 {
      %c0_100 = arith.constant 0 : index
      %c0_101 = arith.constant 0 : index
      %118 = vector.load %arg8[%c0_100, %c0_101] : memref<8x128xf32, #tpu.memory_space<vmem>>, vector<8x128xf32>
      %c0_102 = arith.constant 0 : index
      %c0_103 = arith.constant 0 : index
      %119 = vector.load %arg7[%c0_102, %c0_103] : memref<8x128xf32, #tpu.memory_space<vmem>>, vector<8x128xf32>
      tpu.vector_store %arg7[%c0_102, %c0_103], %118 {strides = array<i32>} : memref<8x128xf32, #tpu.memory_space<vmem>>, vector<8x128xf32>,
    } else {
    }
    return
  }
  func.func @transform_0(%arg0: i32) -> (i32, i32, i32) {
    %c0_i32 = arith.constant 0 : i32
    %c0_i32_0 = arith.constant 0 : i32
    %c0_i32_1 = arith.constant 0 : i32
    return %arg0, %c0_i32, %c0_i32_0 : i32, i32, i32
  }
  func.func @transform_1(%arg0: i32) -> (i32, i32) {
    %c0_i32 = arith.constant 0 : i32
    %c0_i32_0 = arith.constant 0 : i32
    %c0_i32_1 = arith.constant 0 : i32
    return %c0_i32, %c0_i32_0 : i32, i32
  }
  func.func @transform_2(%arg0: i32) -> (i32, i32) {
    %c0_i32 = arith.constant 0 : i32
    %c0_i32_0 = arith.constant 0 : i32
    %c0_i32_1 = arith.constant 0 : i32
    return %c0_i32, %c0_i32_0 : i32, i32
  }
  func.func @transform_3(%arg0: i32) -> (i32, i32) {
    %c0_i32 = arith.constant 0 : i32
    %c0_i32_0 = arith.constant 0 : i32
    %c0_i32_1 = arith.constant 0 : i32
    return %c0_i32, %c0_i32_0 : i32, i32
  }
  func.func @transform_4(%arg0: i32) -> (i32, i32) {
    %c0_i32 = arith.constant 0 : i32
    %c0_i32_0 = arith.constant 0 : i32
    %c0_i32_1 = arith.constant 0 : i32
    return %c0_i32, %c0_i32_0 : i32, i32
  }
  func.func @transform_5(%arg0: i32) -> (i32, i32) {
    %c0_i32 = arith.constant 0 : i32
    %c0_i32_0 = arith.constant 0 : i32
    return %arg0, %c0_i32 : i32, i32
  }
  func.func @transform_6(%arg0: i32) -> (i32, i32) {
    %c0_i32 = arith.constant 0 : i32
    %c0_i32_0 = arith.constant 0 : i32
    %c0_i32_1 = arith.constant 0 : i32
    return %c0_i32, %c0_i32_0 : i32, i32
  }
}

</mosaic_0001>

<llo_original>
// kernel: tpu_custom_call.1
$region0: #{tpu_custom_call.1}
  #allocation0 [shape = 'u32[]', space=smem, size = 0x4, offset = 0x4, fixed_abs, tag = 'smem constant byte address 0x4 - core index']
  #allocation1 [shape = 'u32[144,128]{1,0:T(1,128)}', space=vmem, size = 0x12000, scoped, tag = 'internal scratch']
  #allocation2 [shape = 'f32[8,128]{1,0:T(8,128)}', space=vmem, size = 0x1000, scoped, tag = 'scratch operand']
  #allocation3 [shape = 'f32[8,8,128]{2,1,0:T(8,128)}', space=vmem, size = 0x8000, scoped, tag = 'scratch operand']
  %s0 = inlined_call_operand.hbm [shape: f32[8,8,128], index: 0, kind: input, shape index: {}]
  %s1 = inlined_call_operand.hbm [shape: f32[8,128], index: 1, kind: input, shape index: {}]
  %s2 = inlined_call_operand.hbm [shape: f32[128,128], index: 2, kind: input, shape index: {}]
  %s3 = inlined_call_operand.hbm [shape: f32[128,128], index: 3, kind: input, shape index: {}]
  %s4 = inlined_call_operand.vmem [shape: f32[1,128], index: 4, kind: input, shape index: {}]
  %s5 = inlined_call_operand.hbm [shape: f32[64,128], index: 5, kind: output, shape index: {0}]
  %s6 = inlined_call_operand.hbm [shape: f32[8,128], index: 6, kind: output, shape index: {1}]
  %7 = xla_tuple %s5, %s6
  %s8 = sld [smem:[#allocation0]]
  $region62: #{tpu_custom_call.1} parent=0
    _
  %s10 = ssub.s32 1, %s8
  %s11 = scalar_select 0, %s10, %s8
  $region1: #{tpu_custom_call.1} parent=0
    #allocation4 [shape = 'u8[32768]{0}', space=vmem, size = 0x8000, scoped, tag = 'input window, operand 0, single buffered']
    #allocation5 [shape = 's32[1]{0}', space=sflag, size = 0x4, scoped, tag = 'scoped memory for tpu_custom_call.1']
    #allocation6 [shape = 's32[1]{0}', space=sflag, size = 0x4, scoped, tag = 'scoped memory for tpu_custom_call.1']
    #allocation7 [shape = 'u8[4096]{0}', space=vmem, size = 0x1000, scoped, tag = 'input window, operand 1, single buffered']
    #allocation8 [shape = 's32[1]{0}', space=sflag, size = 0x4, scoped, tag = 'scoped memory for tpu_custom_call.1']
    #allocation9 [shape = 'u8[65536]{0}', space=vmem, size = 0x10000, scoped, tag = 'input window, operand 2, single buffered']
    #allocation10 [shape = 'u8[65536]{0}', space=vmem, size = 0x10000, scoped, tag = 'input window, operand 3, single buffered']
    #allocation11 [shape = 's32[1]{0}', space=sflag, size = 0x4, scoped, tag = 'scoped memory for tpu_custom_call.1']
    #allocation12 [shape = 'u8[32768]{0}', space=vmem, size = 0x8000, scoped, tag = 'output window, operand 0, single buffered']
    #allocation13 [shape = 'u8[4096]{0}', space=vmem, size = 0x1000, scoped, tag = 'output window, operand 1, single buffered']
    #allocation14 [shape = 's32[1]{0}', space=sflag, size = 0x4, scoped, tag = 'scoped memory for tpu_custom_call.1']
    %12 = vsyncpa [#allocation5], 0
    %13 = vsyncpa [#allocation8], 0
    %14 = vsyncpa [#allocation11], 0
    %15 = vsyncpa [#allocation6], 0
    %16 = vsyncpa [#allocation14], 0
    // Predicated region
    $region2: #{tpu_custom_call.1} parent=1 // pred_check
      _
    $region3: #{tpu_custom_call.1} parent=1 // pred_check_branch
      %18 = sbr.rel (0) target = $region5
    $region4: #{tpu_custom_call.1} parent=1 // pred_region
      %s20 = ssub.s32 1024, 1024
      %21 = vsyncadd [#allocation5], %s20
      %s22 = sshll.u32 [#allocation4], 4
      %s23 = int_to_ptr.vmem [resolvable:$true] %s22
      %28 = dma.hbm_to_vmem [thread:$0]  %s0, 1024, %s23, [#allocation5], 128, 128, 8
    $region5: #{tpu_custom_call.1} parent=1 // pred_fallthru
      _
    // Predicated region
    $region6: #{tpu_custom_call.1} parent=1 // pred_check
      _
    $region7: #{tpu_custom_call.1} parent=1 // pred_check_branch
      %30 = sbr.rel (0) target = $region9
    $region8: #{tpu_custom_call.1} parent=1 // pred_region
      %s32 = ssub.s32 128, 128
      %33 = vsyncadd [#allocation8], %s32
      %s35 = sshll.u32 [#allocation7], 4
      %s36 = int_to_ptr.vmem [resolvable:$true] %s35
      %38 = dma.hbm_to_vmem [thread:$0]  %s1, 128, %s36, [#allocation8]
    $region9: #{tpu_custom_call.1} parent=1 // pred_fallthru
      _
    // Predicated region
    $region10: #{tpu_custom_call.1} parent=1 // pred_check
      _
    $region11: #{tpu_custom_call.1} parent=1 // pred_check_branch
      %40 = sbr.rel (0) target = $region13
    $region12: #{tpu_custom_call.1} parent=1 // pred_region
      %s42 = ssub.s32 2048, 2048
      %43 = vsyncadd [#allocation8], %s42
      %s44 = sshll.u32 [#allocation9], 4
      %s45 = int_to_ptr.vmem [resolvable:$true] %s44
      %50 = dma.hbm_to_vmem [thread:$0]  %s2, 2048, %s45, [#allocation8], 128, 128, 8
    $region13: #{tpu_custom_call.1} parent=1 // pred_fallthru
      _
    // Predicated region
    $region14: #{tpu_custom_call.1} parent=1 // pred_check
      _
    $region15: #{tpu_custom_call.1} parent=1 // pred_check_branch
      %52 = sbr.rel (0) target = $region17
    $region16: #{tpu_custom_call.1} parent=1 // pred_region
      %s54 = ssub.s32 2048, 2048
      %55 = vsyncadd [#allocation11], %s54
      %s56 = sshll.u32 [#allocation10], 4
      %s57 = int_to_ptr.vmem [resolvable:$true] %s56
      %62 = dma.hbm_to_vmem [thread:$0]  %s3, 2048, %s57, [#allocation11], 128, 128, 8
    $region17: #{tpu_custom_call.1} parent=1 // pred_fallthru
      _
    // Predicated region
    $region18: #{tpu_custom_call.1} parent=1 // pred_check
      _
    $region19: #{tpu_custom_call.1} parent=1 // pred_check_branch
      %64 = sbr.rel (0) target = $region21
    $region20: #{tpu_custom_call.1} parent=1 // pred_region
      _
    $region21: #{tpu_custom_call.1} parent=1 // pred_fallthru
      _
    // Predicated region
    $region22: #{tpu_custom_call.1} parent=1 // pred_check
      _
    $region23: #{tpu_custom_call.1} parent=1 // pred_check_branch
      %66 = sbr.rel (0) target = $region25
    $region24: #{tpu_custom_call.1} parent=1 // pred_region
      %67 = dma.done [#allocation5], 1024
    $region25: #{tpu_custom_call.1} parent=1 // pred_fallthru
      _
    // Predicated region
    $region26: #{tpu_custom_call.1} parent=1 // pred_check
      _
    $region27: #{tpu_custom_call.1} parent=1 // pred_check_branch
      %69 = sbr.rel (0) target = $region29
    $region28: #{tpu_custom_call.1} parent=1 // pred_region
      %70 = dma.done [#allocation8], 128
    $region29: #{tpu_custom_call.1} parent=1 // pred_fallthru
      _
    // Predicated region
    $region30: #{tpu_custom_call.1} parent=1 // pred_check
      _
    $region31: #{tpu_custom_call.1} parent=1 // pred_check_branch
      %72 = sbr.rel (0) target = $region33
    $region32: #{tpu_custom_call.1} parent=1 // pred_region
      %73 = dma.done [#allocation8], 2048
    $region33: #{tpu_custom_call.1} parent=1 // pred_fallthru
      _
    // Predicated region
    $region34: #{tpu_custom_call.1} parent=1 // pred_check
      _
    $region35: #{tpu_custom_call.1} parent=1 // pred_check_branch
      %75 = sbr.rel (0) target = $region37
    $region36: #{tpu_custom_call.1} parent=1 // pred_region
      %76 = dma.done [#allocation11], 2048
    $region37: #{tpu_custom_call.1} parent=1 // pred_fallthru
      _
    %p77 = scmp.eq.s32.totalorder 0, 0
    // Predicated region
    $region38: #{tpu_custom_call.1} parent=1 // pred_check
      %p78 = pneg %p77
    $region39: #{tpu_custom_call.1} parent=1 // pred_check_branch
      %80 = sbr.rel (%p78) target = $region41
    $region40: #{tpu_custom_call.1} parent=1 // pred_region
      %v81 = vld [vmem:[#allocation7] sm:$0xff]
      %82 = vst [vmem:[#allocation2] sm:$0xff] %v81
    $region41: #{tpu_custom_call.1} parent=1 // pred_fallthru
      _
    %v83 = vld [vmem:[#allocation2] sm:$0xff]
    %v84 = vld [vmem:[#allocation4] sm:$0xff]
    %v85 = vld [vmem:[#allocation9] sm:$0xff]
    %v86 = vld [vmem:[#allocation9 + $0x8] sm:$0xff]
    %v87 = vld [vmem:[#allocation9 + $0x10] sm:$0xff]
    %v88 = vld [vmem:[#allocation9 + $0x18] sm:$0xff]
    %v89 = vld [vmem:[#allocation9 + $0x20] sm:$0xff]
    %v90 = vld [vmem:[#allocation9 + $0x28] sm:$0xff]
    %v91 = vld [vmem:[#allocation9 + $0x30] sm:$0xff]
    %v92 = vld [vmem:[#allocation9 + $0x38] sm:$0xff]
    %v93 = vld [vmem:[#allocation9 + $0x40] sm:$0xff]
    %v94 = vld [vmem:[#allocation9 + $0x48] sm:$0xff]
    %v95 = vld [vmem:[#allocation9 + $0x50] sm:$0xff]
    %v96 = vld [vmem:[#allocation9 + $0x58] sm:$0xff]
    %v97 = vld [vmem:[#allocation9 + $0x60] sm:$0xff]
    %v98 = vld [vmem:[#allocation9 + $0x68] sm:$0xff]
    %v99 = vld [vmem:[#allocation9 + $0x70] sm:$0xff]
    %v100 = vld [vmem:[#allocation9 + $0x78] sm:$0xff]
    %101 = vmatprep.subr.mxu0 0.0
    %102 = vmatpush1.msra.mxu0 %v100
    %103 = vmatprep.subr.mxu0 0.0
    %104 = vmatpush1.msra.mxu0 %v99
    %105 = vmatprep.subr.mxu0 0.0
    %106 = vmatpush1.msra.mxu0 %v98
    %107 = vmatprep.subr.mxu0 0.0
    %108 = vmatpush1.msra.mxu0 %v97
    %109 = vmatprep.subr.mxu0 0.0
    %110 = vmatpush1.msra.mxu0 %v96
    %111 = vmatprep.subr.mxu0 0.0
    %112 = vmatpush1.msra.mxu0 %v95
    %113 = vmatprep.subr.mxu0 0.0
    %114 = vmatpush1.msra.mxu0 %v94
    %115 = vmatprep.subr.mxu0 0.0
    %116 = vmatpush1.msra.mxu0 %v93
    %117 = vmatprep.subr.mxu0 0.0
    %118 = vmatpush1.msra.mxu0 %v92
    %119 = vmatprep.subr.mxu0 0.0
    %120 = vmatpush1.msra.mxu0 %v91
    %121 = vmatprep.subr.mxu0 0.0
    %122 = vmatpush1.msra.mxu0 %v90
    %123 = vmatprep.subr.mxu0 0.0
    %124 = vmatpush1.msra.mxu0 %v89
    %125 = vmatprep.subr.mxu0 0.0
    %126 = vmatpush1.msra.mxu0 %v88
    %127 = vmatprep.subr.mxu0 0.0
    %128 = vmatpush1.msra.mxu0 %v87
    %129 = vmatprep.subr.mxu0 0.0
    %130 = vmatpush1.msra.mxu0 %v86
    %131 = vmatprep.subr.mxu0 0.0
    %132 = vmatpush1.msra.mxu0 %v85
    %133 = vmatprep.subr.mxu0 0.0
    %134 = vmatpush2.msra.mxu0 0.0
    %135 = vmatprep.subr.mxu0 0.0
    %136 = vmatpush2.msra.mxu0 0.0
    %137 = vmatprep.subr.mxu0 0.0
    %138 = vmatpush2.msra.mxu0 0.0
    %139 = vmatprep.subr.mxu0 0.0
    %140 = vmatpush2.msra.mxu0 0.0
    %141 = vmatprep.subr.mxu0 0.0
    %142 = vmatpush2.msra.mxu0 0.0
    %143 = vmatprep.subr.mxu0 0.0
    %144 = vmatpush2.msra.mxu0 0.0
    %145 = vmatprep.subr.mxu0 0.0
    %146 = vmatpush2.msra.mxu0 0.0
    %147 = vmatprep.subr.mxu0 0.0
    %148 = vmatpush2.msra.mxu0 0.0
    %149 = vmatprep.subr.mxu0 0.0
    %150 = vmatpush2.msra.mxu0 0.0
    %151 = vmatprep.subr.mxu0 0.0
    %152 = vmatpush2.msra.mxu0 0.0
    %153 = vmatprep.subr.mxu0 0.0
    %154 = vmatpush2.msra.mxu0 0.0
    %155 = vmatprep.subr.mxu0 0.0
    %156 = vmatpush2.msra.mxu0 0.0
    %157 = vmatprep.subr.mxu0 0.0
    %158 = vmatpush2.msra.mxu0 0.0
    %159 = vmatprep.subr.mxu0 0.0
    %160 = vmatpush2.msra.mxu0 0.0
    %161 = vmatprep.subr.mxu0 0.0
    %162 = vmatpush2.msra.mxu0 0.0
    %163 = vmatprep.subr.mxu0 0.0
    %164 = vmatpush2.msra.mxu0 0.0
    %165 = vmatprep.mubr.f32.mxu0 0.0
    %166 = vmatmul.mubr.f32.gmra.mxu0 %v83
    %v167 = vpop.f32.mrf.mxu0
    %v168 = vadd.f32 0.0, %v167
    %v169 = vpop.f32.mrf.mxu0
    %170 = vdwg.mxu0
    %v171 = vadd.f32 %v84, %v168
    %v172 = vtanh.pop %v171
    %173 = vst [vmem:[#allocation2] sm:$0xff] %v172
    %174 = vst [vmem:[#allocation3] sm:$0xff] %v172
    %v175 = vld [vmem:[#allocation2] sm:$0xff]
    %s176 = scalar_lea.vmem [#allocation4], 8
    %v177 = vld [vmem:[%s176] sm:$0xff]
    %v178 = vld [vmem:[#allocation9] sm:$0xff]
    %v179 = vld [vmem:[#allocation9 + $0x8] sm:$0xff]
    %v180 = vld [vmem:[#allocation9 + $0x10] sm:$0xff]
    %v181 = vld [vmem:[#allocation9 + $0x18] sm:$0xff]
    %v182 = vld [vmem:[#allocation9 + $0x20] sm:$0xff]
    %v183 = vld [vmem:[#allocation9 + $0x28] sm:$0xff]
    %v184 = vld [vmem:[#allocation9 + $0x30] sm:$0xff]
    %v185 = vld [vmem:[#allocation9 + $0x38] sm:$0xff]
    %v186 = vld [vmem:[#allocation9 + $0x40] sm:$0xff]
    %v187 = vld [vmem:[#allocation9 + $0x48] sm:$0xff]
    %v188 = vld [vmem:[#allocation9 + $0x50] sm:$0xff]
    %v189 = vld [vmem:[#allocation9 + $0x58] sm:$0xff]
    %v190 = vld [vmem:[#allocation9 + $0x60] sm:$0xff]
    %v191 = vld [vmem:[#allocation9 + $0x68] sm:$0xff]
    %v192 = vld [vmem:[#allocation9 + $0x70] sm:$0xff]
    %v193 = vld [vmem:[#allocation9 + $0x78] sm:$0xff]
    %194 = vmatprep.subr.mxu0 0.0
    %195 = vmatpush1.msra.mxu0 %v193
    %196 = vmatprep.subr.mxu0 0.0
    %197 = vmatpush1.msra.mxu0 %v192
    %198 = vmatprep.subr.mxu0 0.0
    %199 = vmatpush1.msra.mxu0 %v191
    %200 = vmatprep.subr.mxu0 0.0
    %201 = vmatpush1.msra.mxu0 %v190
    %202 = vmatprep.subr.mxu0 0.0
    %203 = vmatpush1.msra.mxu0 %v189
    %204 = vmatprep.subr.mxu0 0.0
    %205 = vmatpush1.msra.mxu0 %v188
    %206 = vmatprep.subr.mxu0 0.0
    %207 = vmatpush1.msra.mxu0 %v187
    %208 = vmatprep.subr.mxu0 0.0
    %209 = vmatpush1.msra.mxu0 %v186
    %210 = vmatprep.subr.mxu0 0.0
    %211 = vmatpush1.msra.mxu0 %v185
    %212 = vmatprep.subr.mxu0 0.0
    %213 = vmatpush1.msra.mxu0 %v184
    %214 = vmatprep.subr.mxu0 0.0
    %215 = vmatpush1.msra.mxu0 %v183
    %216 = vmatprep.subr.mxu0 0.0
    %217 = vmatpush1.msra.mxu0 %v182
    %218 = vmatprep.subr.mxu0 0.0
    %219 = vmatpush1.msra.mxu0 %v181
    %220 = vmatprep.subr.mxu0 0.0
    %221 = vmatpush1.msra.mxu0 %v180
    %222 = vmatprep.subr.mxu0 0.0
    %223 = vmatpush1.msra.mxu0 %v179
    %224 = vmatprep.subr.mxu0 0.0
    %225 = vmatpush1.msra.mxu0 %v178
    %226 = vmatprep.subr.mxu0 0.0
    %227 = vmatpush2.msra.mxu0 0.0
    %228 = vmatprep.subr.mxu0 0.0
    %229 = vmatpush2.msra.mxu0 0.0
    %230 = vmatprep.subr.mxu0 0.0
    %231 = vmatpush2.msra.mxu0 0.0
    %232 = vmatprep.subr.mxu0 0.0
    %233 = vmatpush2.msra.mxu0 0.0
    %234 = vmatprep.subr.mxu0 0.0
    %235 = vmatpush2.msra.mxu0 0.0
    %236 = vmatprep.subr.mxu0 0.0
    %237 = vmatpush2.msra.mxu0 0.0
    %238 = vmatprep.subr.mxu0 0.0
    %239 = vmatpush2.msra.mxu0 0.0
    %240 = vmatprep.subr.mxu0 0.0
    %241 = vmatpush2.msra.mxu0 0.0
    %242 = vmatprep.subr.mxu0 0.0
    %243 = vmatpush2.msra.mxu0 0.0
    %244 = vmatprep.subr.mxu0 0.0
    %245 = vmatpush2.msra.mxu0 0.0
    %246 = vmatprep.subr.mxu0 0.0
    %247 = vmatpush2.msra.mxu0 0.0
    %248 = vmatprep.subr.mxu0 0.0
    %249 = vmatpush2.msra.mxu0 0.0
    %250 = vmatprep.subr.mxu0 0.0
    %251 = vmatpush2.msra.mxu0 0.0
    %252 = vmatprep.subr.mxu0 0.0
    %253 = vmatpush2.msra.mxu0 0.0
    %254 = vmatprep.subr.mxu0 0.0
    %255 = vmatpush2.msra.mxu0 0.0
    %256 = vmatprep.subr.mxu0 0.0
    %257 = vmatpush2.msra.mxu0 0.0
    %258 = vmatprep.mubr.f32.mxu0 0.0
    %259 = vmatmul.mubr.f32.gmra.mxu0 %v175
    %v260 = vpop.f32.mrf.mxu0
    %v261 = vadd.f32 0.0, %v260
    %v262 = vpop.f32.mrf.mxu0
    %263 = vdwg.mxu0
    %v264 = vadd.f32 %v177, %v261
    %v265 = vtanh.pop %v264
    %266 = vst [vmem:[#allocation2] sm:$0xff] %v265
    %s267 = scalar_lea.vmem [#allocation3], 8
    %268 = vst [vmem:[%s267] sm:$0xff] %v265
    %v269 = vld [vmem:[#allocation2] sm:$0xff]
    %s270 = scalar_lea.vmem [#allocation4], 16
    %v271 = vld [vmem:[%s270] sm:$0xff]
    %v272 = vld [vmem:[#allocation9] sm:$0xff]
    %v273 = vld [vmem:[#allocation9 + $0x8] sm:$0xff]
    %v274 = vld [vmem:[#allocation9 + $0x10] sm:$0xff]
    %v275 = vld [vmem:[#allocation9 + $0x18] sm:$0xff]
    %v276 = vld [vmem:[#allocation9 + $0x20] sm:$0xff]
    %v277 = vld [vmem:[#allocation9 + $0x28] sm:$0xff]
    %v278 = vld [vmem:[#allocation9 + $0x30] sm:$0xff]
    %v279 = vld [vmem:[#allocation9 + $0x38] sm:$0xff]
    %v280 = vld [vmem:[#allocation9 + $0x40] sm:$0xff]
    %v281 = vld [vmem:[#allocation9 + $0x48] sm:$0xff]
    %v282 = vld [vmem:[#allocation9 + $0x50] sm:$0xff]
    %v283 = vld [vmem:[#allocation9 + $0x58] sm:$0xff]
    %v284 = vld [vmem:[#allocation9 + $0x60] sm:$0xff]
    %v285 = vld [vmem:[#allocation9 + $0x68] sm:$0xff]
    %v286 = vld [vmem:[#allocation9 + $0x70] sm:$0xff]
    %v287 = vld [vmem:[#allocation9 + $0x78] sm:$0xff]
    %288 = vmatprep.subr.mxu0 0.0
    %289 = vmatpush1.msra.mxu0 %v287
    %290 = vmatprep.subr.mxu0 0.0
    %291 = vmatpush1.msra.mxu0 %v286
    %292 = vmatprep.subr.mxu0 0.0
    %293 = vmatpush1.msra.mxu0 %v285
    %294 = vmatprep.subr.mxu0 0.0
    %295 = vmatpush1.msra.mxu0 %v284
    %296 = vmatprep.subr.mxu0 0.0
    %297 = vmatpush1.msra.mxu0 %v283
    %298 = vmatprep.subr.mxu0 0.0
    %299 = vmatpush1.msra.mxu0 %v282
    %300 = vmatprep.subr.mxu0 0.0
    %301 = vmatpush1.msra.mxu0 %v281
    %302 = vmatprep.subr.mxu0 0.0
    %303 = vmatpush1.msra.mxu0 %v280
    %304 = vmatprep.subr.mxu0 0.0
    %305 = vmatpush1.msra.mxu0 %v279
    %306 = vmatprep.subr.mxu0 0.0
    %307 = vmatpush1.msra.mxu0 %v278
    %308 = vmatprep.subr.mxu0 0.0
    %309 = vmatpush1.msra.mxu0 %v277
    %310 = vmatprep.subr.mxu0 0.0
    %311 = vmatpush1.msra.mxu0 %v276
    %312 = vmatprep.subr.mxu0 0.0
    %313 = vmatpush1.msra.mxu0 %v275
    %314 = vmatprep.subr.mxu0 0.0
    %315 = vmatpush1.msra.mxu0 %v274
    %316 = vmatprep.subr.mxu0 0.0
    %317 = vmatpush1.msra.mxu0 %v273
    %318 = vmatprep.subr.mxu0 0.0
    %319 = vmatpush1.msra.mxu0 %v272
    %320 = vmatprep.subr.mxu0 0.0
    %321 = vmatpush2.msra.mxu0 0.0
    %322 = vmatprep.subr.mxu0 0.0
    %323 = vmatpush2.msra.mxu0 0.0
    %324 = vmatprep.subr.mxu0 0.0
    %325 = vmatpush2.msra.mxu0 0.0
    %326 = vmatprep.subr.mxu0 0.0
    %327 = vmatpush2.msra.mxu0 0.0
    %328 = vmatprep.subr.mxu0 0.0
    %329 = vmatpush2.msra.mxu0 0.0
    %330 = vmatprep.subr.mxu0 0.0
    %331 = vmatpush2.msra.mxu0 0.0
    %332 = vmatprep.subr.mxu0 0.0
    %333 = vmatpush2.msra.mxu0 0.0
    %334 = vmatprep.subr.mxu0 0.0
    %335 = vmatpush2.msra.mxu0 0.0
    %336 = vmatprep.subr.mxu0 0.0
    %337 = vmatpush2.msra.mxu0 0.0
    %338 = vmatprep.subr.mxu0 0.0
    %339 = vmatpush2.msra.mxu0 0.0
    %340 = vmatprep.subr.mxu0 0.0
    %341 = vmatpush2.msra.mxu0 0.0
    %342 = vmatprep.subr.mxu0 0.0
    %343 = vmatpush2.msra.mxu0 0.0
    %344 = vmatprep.subr.mxu0 0.0
    %345 = vmatpush2.msra.mxu0 0.0
    %346 = vmatprep.subr.mxu0 0.0
    %347 = vmatpush2.msra.mxu0 0.0
    %348 = vmatprep.subr.mxu0 0.0
    %349 = vmatpush2.msra.mxu0 0.0
    %350 = vmatprep.subr.mxu0 0.0
    %351 = vmatpush2.msra.mxu0 0.0
    %352 = vmatprep.mubr.f32.mxu0 0.0
    %353 = vmatmul.mubr.f32.gmra.mxu0 %v269
    %v354 = vpop.f32.mrf.mxu0
    %v355 = vadd.f32 0.0, %v354
    %v356 = vpop.f32.mrf.mxu0
    %357 = vdwg.mxu0
    %v358 = vadd.f32 %v271, %v355
    %v359 = vtanh.pop %v358
    %360 = vst [vmem:[#allocation2] sm:$0xff] %v359
    %s361 = scalar_lea.vmem [#allocation3], 16
    %362 = vst [vmem:[%s361] sm:$0xff] %v359
    %v363 = vld [vmem:[#allocation2] sm:$0xff]
    %s364 = scalar_lea.vmem [#allocation4], 24
    %v365 = vld [vmem:[%s364] sm:$0xff]
    %v366 = vld [vmem:[#allocation9] sm:$0xff]
    %v367 = vld [vmem:[#allocation9 + $0x8] sm:$0xff]
    %v368 = vld [vmem:[#allocation9 + $0x10] sm:$0xff]
    %v369 = vld [vmem:[#allocation9 + $0x18] sm:$0xff]
    %v370 = vld [vmem:[#allocation9 + $0x20] sm:$0xff]
    %v371 = vld [vmem:[#allocation9 + $0x28] sm:$0xff]
    %v372 = vld [vmem:[#allocation9 + $0x30] sm:$0xff]
    %v373 = vld [vmem:[#allocation9 + $0x38] sm:$0xff]
    %v374 = vld [vmem:[#allocation9 + $0x40] sm:$0xff]
    %v375 = vld [vmem:[#allocation9 + $0x48] sm:$0xff]
    %v376 = vld [vmem:[#allocation9 + $0x50] sm:$0xff]
    %v377 = vld [vmem:[#allocation9 + $0x58] sm:$0xff]
    %v378 = vld [vmem:[#allocation9 + $0x60] sm:$0xff]
    %v379 = vld [vmem:[#allocation9 + $0x68] sm:$0xff]
    %v380 = vld [vmem:[#allocation9 + $0x70] sm:$0xff]
    %v381 = vld [vmem:[#allocation9 + $0x78] sm:$0xff]
    %382 = vmatprep.subr.mxu0 0.0
    %383 = vmatpush1.msra.mxu0 %v381
    %384 = vmatprep.subr.mxu0 0.0
    %385 = vmatpush1.msra.mxu0 %v380
    %386 = vmatprep.subr.mxu0 0.0
    %387 = vmatpush1.msra.mxu0 %v379
    %388 = vmatprep.subr.mxu0 0.0
    %389 = vmatpush1.msra.mxu0 %v378
    %390 = vmatprep.subr.mxu0 0.0
    %391 = vmatpush1.msra.mxu0 %v377
    %392 = vmatprep.subr.mxu0 0.0
    %393 = vmatpush1.msra.mxu0 %v376
    %394 = vmatprep.subr.mxu0 0.0
    %395 = vmatpush1.msra.mxu0 %v375
    %396 = vmatprep.subr.mxu0 0.0
    %397 = vmatpush1.msra.mxu0 %v374
    %398 = vmatprep.subr.mxu0 0.0
    %399 = vmatpush1.msra.mxu0 %v373
    %400 = vmatprep.subr.mxu0 0.0
    %401 = vmatpush1.msra.mxu0 %v372
    %402 = vmatprep.subr.mxu0 0.0
    %403 = vmatpush1.msra.mxu0 %v371
    %404 = vmatprep.subr.mxu0 0.0
    %405 = vmatpush1.msra.mxu0 %v370
    %406 = vmatprep.subr.mxu0 0.0
    %407 = vmatpush1.msra.mxu0 %v369
    %408 = vmatprep.subr.mxu0 0.0
    %409 = vmatpush1.msra.mxu0 %v368
    %410 = vmatprep.subr.mxu0 0.0
    %411 = vmatpush1.msra.mxu0 %v367
    %412 = vmatprep.subr.mxu0 0.0
    %413 = vmatpush1.msra.mxu0 %v366
    %414 = vmatprep.subr.mxu0 0.0
    %415 = vmatpush2.msra.mxu0 0.0
    %416 = vmatprep.subr.mxu0 0.0
    %417 = vmatpush2.msra.mxu0 0.0
    %418 = vmatprep.subr.mxu0 0.0
    %419 = vmatpush2.msra.mxu0 0.0
    %420 = vmatprep.subr.mxu0 0.0
    %421 = vmatpush2.msra.mxu0 0.0
    %422 = vmatprep.subr.mxu0 0.0
    %423 = vmatpush2.msra.mxu0 0.0
    %424 = vmatprep.subr.mxu0 0.0
    %425 = vmatpush2.msra.mxu0 0.0
    %426 = vmatprep.subr.mxu0 0.0
    %427 = vmatpush2.msra.mxu0 0.0
    %428 = vmatprep.subr.mxu0 0.0
    %429 = vmatpush2.msra.mxu0 0.0
    %430 = vmatprep.subr.mxu0 0.0
    %431 = vmatpush2.msra.mxu0 0.0
    %432 = vmatprep.subr.mxu0 0.0
    %433 = vmatpush2.msra.mxu0 0.0
    %434 = vmatprep.subr.mxu0 0.0
    %435 = vmatpush2.msra.mxu0 0.0
    %436 = vmatprep.subr.mxu0 0.0
    %437 = vmatpush2.msra.mxu0 0.0
    %438 = vmatprep.subr.mxu0 0.0
    %439 = vmatpush2.msra.mxu0 0.0
    %440 = vmatprep.subr.mxu0 0.0
    %441 = vmatpush2.msra.mxu0 0.0
    %442 = vmatprep.subr.mxu0 0.0
    %443 = vmatpush2.msra.mxu0 0.0
    %444 = vmatprep.subr.mxu0 0.0
    %445 = vmatpush2.msra.mxu0 0.0
    %446 = vmatprep.mubr.f32.mxu0 0.0
    %447 = vmatmul.mubr.f32.gmra.mxu0 %v363
    %v448 = vpop.f32.mrf.mxu0
    %v449 = vadd.f32 0.0, %v448
    %v450 = vpop.f32.mrf.mxu0
    %451 = vdwg.mxu0
    %v452 = vadd.f32 %v365, %v449
    %v453 = vtanh.pop %v452
    %454 = vst [vmem:[#allocation2] sm:$0xff] %v453
    %s455 = scalar_lea.vmem [#allocation3], 24
    %456 = vst [vmem:[%s455] sm:$0xff] %v453
    %v457 = vld [vmem:[#allocation2] sm:$0xff]
    %s458 = scalar_lea.vmem [#allocation4], 32
    %v459 = vld [vmem:[%s458] sm:$0xff]
    %v460 = vld [vmem:[#allocation9] sm:$0xff]
    %v461 = vld [vmem:[#allocation9 + $0x8] sm:$0xff]
    %v462 = vld [vmem:[#allocation9 + $0x10] sm:$0xff]
    %v463 = vld [vmem:[#allocation9 + $0x18] sm:$0xff]
    %v464 = vld [vmem:[#allocation9 + $0x20] sm:$0xff]
    %v465 = vld [vmem:[#allocation9 + $0x28] sm:$0xff]
    %v466 = vld [vmem:[#allocation9 + $0x30] sm:$0xff]
    %v467 = vld [vmem:[#allocation9 + $0x38] sm:$0xff]
    %v468 = vld [vmem:[#allocation9 + $0x40] sm:$0xff]
    %v469 = vld [vmem:[#allocation9 + $0x48] sm:$0xff]
    %v470 = vld [vmem:[#allocation9 + $0x50] sm:$0xff]
    %v471 = vld [vmem:[#allocation9 + $0x58] sm:$0xff]
    %v472 = vld [vmem:[#allocation9 + $0x60] sm:$0xff]
    %v473 = vld [vmem:[#allocation9 + $0x68] sm:$0xff]
    %v474 = vld [vmem:[#allocation9 + $0x70] sm:$0xff]
    %v475 = vld [vmem:[#allocation9 + $0x78] sm:$0xff]
    %476 = vmatprep.subr.mxu0 0.0
    %477 = vmatpush1.msra.mxu0 %v475
    %478 = vmatprep.subr.mxu0 0.0
    %479 = vmatpush1.msra.mxu0 %v474
    %480 = vmatprep.subr.mxu0 0.0
    %481 = vmatpush1.msra.mxu0 %v473
    %482 = vmatprep.subr.mxu0 0.0
    %483 = vmatpush1.msra.mxu0 %v472
    %484 = vmatprep.subr.mxu0 0.0
    %485 = vmatpush1.msra.mxu0 %v471
    %486 = vmatprep.subr.mxu0 0.0
    %487 = vmatpush1.msra.mxu0 %v470
    %488 = vmatprep.subr.mxu0 0.0
    %489 = vmatpush1.msra.mxu0 %v469
    %490 = vmatprep.subr.mxu0 0.0
    %491 = vmatpush1.msra.mxu0 %v468
    %492 = vmatprep.subr.mxu0 0.0
    %493 = vmatpush1.msra.mxu0 %v467
    %494 = vmatprep.subr.mxu0 0.0
    %495 = vmatpush1.msra.mxu0 %v466
    %496 = vmatprep.subr.mxu0 0.0
    %497 = vmatpush1.msra.mxu0 %v465
    %498 = vmatprep.subr.mxu0 0.0
    %499 = vmatpush1.msra.mxu0 %v464
    %500 = vmatprep.subr.mxu0 0.0
    %501 = vmatpush1.msra.mxu0 %v463
    %502 = vmatprep.subr.mxu0 0.0
    %503 = vmatpush1.msra.mxu0 %v462
    %504 = vmatprep.subr.mxu0 0.0
    %505 = vmatpush1.msra.mxu0 %v461
    %506 = vmatprep.subr.mxu0 0.0
    %507 = vmatpush1.msra.mxu0 %v460
    %508 = vmatprep.subr.mxu0 0.0
    %509 = vmatpush2.msra.mxu0 0.0
    %510 = vmatprep.subr.mxu0 0.0
    %511 = vmatpush2.msra.mxu0 0.0
    %512 = vmatprep.subr.mxu0 0.0
    %513 = vmatpush2.msra.mxu0 0.0
    %514 = vmatprep.subr.mxu0 0.0
    %515 = vmatpush2.msra.mxu0 0.0
    %516 = vmatprep.subr.mxu0 0.0
    %517 = vmatpush2.msra.mxu0 0.0
    %518 = vmatprep.subr.mxu0 0.0
    %519 = vmatpush2.msra.mxu0 0.0
    %520 = vmatprep.subr.mxu0 0.0
    %521 = vmatpush2.msra.mxu0 0.0
    %522 = vmatprep.subr.mxu0 0.0
    %523 = vmatpush2.msra.mxu0 0.0
    %524 = vmatprep.subr.mxu0 0.0
    %525 = vmatpush2.msra.mxu0 0.0
    %526 = vmatprep.subr.mxu0 0.0
    %527 = vmatpush2.msra.mxu0 0.0
    %528 = vmatprep.subr.mxu0 0.0
    %529 = vmatpush2.msra.mxu0 0.0
    %530 = vmatprep.subr.mxu0 0.0
    %531 = vmatpush2.msra.mxu0 0.0
    %532 = vmatprep.subr.mxu0 0.0
    %533 = vmatpush2.msra.mxu0 0.0
    %534 = vmatprep.subr.mxu0 0.0
    %535 = vmatpush2.msra.mxu0 0.0
    %536 = vmatprep.subr.mxu0 0.0
    %537 = vmatpush2.msra.mxu0 0.0
    %538 = vmatprep.subr.mxu0 0.0
    %539 = vmatpush2.msra.mxu0 0.0
    %540 = vmatprep.mubr.f32.mxu0 0.0
    %541 = vmatmul.mubr.f32.gmra.mxu0 %v457
    %v542 = vpop.f32.mrf.mxu0
    %v543 = vadd.f32 0.0, %v542
    %v544 = vpop.f32.mrf.mxu0
    %545 = vdwg.mxu0
    %v546 = vadd.f32 %v459, %v543
    %v547 = vtanh.pop %v546
    %548 = vst [vmem:[#allocation2] sm:$0xff] %v547
    %s549 = scalar_lea.vmem [#allocation3], 32
    %550 = vst [vmem:[%s549] sm:$0xff] %v547
    %v551 = vld [vmem:[#allocation2] sm:$0xff]
    %s552 = scalar_lea.vmem [#allocation4], 40
    %v553 = vld [vmem:[%s552] sm:$0xff]
    %v554 = vld [vmem:[#allocation9] sm:$0xff]
    %v555 = vld [vmem:[#allocation9 + $0x8] sm:$0xff]
    %v556 = vld [vmem:[#allocation9 + $0x10] sm:$0xff]
    %v557 = vld [vmem:[#allocation9 + $0x18] sm:$0xff]
    %v558 = vld [vmem:[#allocation9 + $0x20] sm:$0xff]
    %v559 = vld [vmem:[#allocation9 + $0x28] sm:$0xff]
    %v560 = vld [vmem:[#allocation9 + $0x30] sm:$0xff]
    %v561 = vld [vmem:[#allocation9 + $0x38] sm:$0xff]
    %v562 = vld [vmem:[#allocation9 + $0x40] sm:$0xff]
    %v563 = vld [vmem:[#allocation9 + $0x48] sm:$0xff]
    %v564 = vld [vmem:[#allocation9 + $0x50] sm:$0xff]
    %v565 = vld [vmem:[#allocation9 + $0x58] sm:$0xff]
    %v566 = vld [vmem:[#allocation9 + $0x60] sm:$0xff]
    %v567 = vld [vmem:[#allocation9 + $0x68] sm:$0xff]
    %v568 = vld [vmem:[#allocation9 + $0x70] sm:$0xff]
    %v569 = vld [vmem:[#allocation9 + $0x78] sm:$0xff]
    %570 = vmatprep.subr.mxu0 0.0
    %571 = vmatpush1.msra.mxu0 %v569
    %572 = vmatprep.subr.mxu0 0.0
    %573 = vmatpush1.msra.mxu0 %v568
    %574 = vmatprep.subr.mxu0 0.0
    %575 = vmatpush1.msra.mxu0 %v567
    %576 = vmatprep.subr.mxu0 0.0
    %577 = vmatpush1.msra.mxu0 %v566
    %578 = vmatprep.subr.mxu0 0.0
    %579 = vmatpush1.msra.mxu0 %v565
    %580 = vmatprep.subr.mxu0 0.0
    %581 = vmatpush1.msra.mxu0 %v564
    %582 = vmatprep.subr.mxu0 0.0
    %583 = vmatpush1.msra.mxu0 %v563
    %584 = vmatprep.subr.mxu0 0.0
    %585 = vmatpush1.msra.mxu0 %v562
    %586 = vmatprep.subr.mxu0 0.0
    %587 = vmatpush1.msra.mxu0 %v561
    %588 = vmatprep.subr.mxu0 0.0
    %589 = vmatpush1.msra.mxu0 %v560
    %590 = vmatprep.subr.mxu0 0.0
    %591 = vmatpush1.msra.mxu0 %v559
    %592 = vmatprep.subr.mxu0 0.0
    %593 = vmatpush1.msra.mxu0 %v558
    %594 = vmatprep.subr.mxu0 0.0
    %595 = vmatpush1.msra.mxu0 %v557
    %596 = vmatprep.subr.mxu0 0.0
    %597 = vmatpush1.msra.mxu0 %v556
    %598 = vmatprep.subr.mxu0 0.0
    %599 = vmatpush1.msra.mxu0 %v555
    %600 = vmatprep.subr.mxu0 0.0
    %601 = vmatpush1.msra.mxu0 %v554
    %602 = vmatprep.subr.mxu0 0.0
    %603 = vmatpush2.msra.mxu0 0.0
    %604 = vmatprep.subr.mxu0 0.0
    %605 = vmatpush2.msra.mxu0 0.0
    %606 = vmatprep.subr.mxu0 0.0
    %607 = vmatpush2.msra.mxu0 0.0
    %608 = vmatprep.subr.mxu0 0.0
    %609 = vmatpush2.msra.mxu0 0.0
    %610 = vmatprep.subr.mxu0 0.0
    %611 = vmatpush2.msra.mxu0 0.0
    %612 = vmatprep.subr.mxu0 0.0
    %613 = vmatpush2.msra.mxu0 0.0
    %614 = vmatprep.subr.mxu0 0.0
    %615 = vmatpush2.msra.mxu0 0.0
    %616 = vmatprep.subr.mxu0 0.0
    %617 = vmatpush2.msra.mxu0 0.0
    %618 = vmatprep.subr.mxu0 0.0
    %619 = vmatpush2.msra.mxu0 0.0
    %620 = vmatprep.subr.mxu0 0.0
    %621 = vmatpush2.msra.mxu0 0.0
    %622 = vmatprep.subr.mxu0 0.0
    %623 = vmatpush2.msra.mxu0 0.0
    %624 = vmatprep.subr.mxu0 0.0
    %625 = vmatpush2.msra.mxu0 0.0
    %626 = vmatprep.subr.mxu0 0.0
    %627 = vmatpush2.msra.mxu0 0.0
    %628 = vmatprep.subr.mxu0 0.0
    %629 = vmatpush2.msra.mxu0 0.0
    %630 = vmatprep.subr.mxu0 0.0
    %631 = vmatpush2.msra.mxu0 0.0
    %632 = vmatprep.subr.mxu0 0.0
    %633 = vmatpush2.msra.mxu0 0.0
    %634 = vmatprep.mubr.f32.mxu0 0.0
    %635 = vmatmul.mubr.f32.gmra.mxu0 %v551
    %v636 = vpop.f32.mrf.mxu0
    %v637 = vadd.f32 0.0, %v636
    %v638 = vpop.f32.mrf.mxu0
    %639 = vdwg.mxu0
    %v640 = vadd.f32 %v553, %v637
    %v641 = vtanh.pop %v640
    %642 = vst [vmem:[#allocation2] sm:$0xff] %v641
    %s643 = scalar_lea.vmem [#allocation3], 40
    %644 = vst [vmem:[%s643] sm:$0xff] %v641
    %v645 = vld [vmem:[#allocation2] sm:$0xff]
    %s646 = scalar_lea.vmem [#allocation4], 48
    %v647 = vld [vmem:[%s646] sm:$0xff]
    %v648 = vld [vmem:[#allocation9] sm:$0xff]
    %v649 = vld [vmem:[#allocation9 + $0x8] sm:$0xff]
    %v650 = vld [vmem:[#allocation9 + $0x10] sm:$0xff]
    %v651 = vld [vmem:[#allocation9 + $0x18] sm:$0xff]
    %v652 = vld [vmem:[#allocation9 + $0x20] sm:$0xff]
    %v653 = vld [vmem:[#allocation9 + $0x28] sm:$0xff]
    %v654 = vld [vmem:[#allocation9 + $0x30] sm:$0xff]
    %v655 = vld [vmem:[#allocation9 + $0x38] sm:$0xff]
    %v656 = vld [vmem:[#allocation9 + $0x40] sm:$0xff]
    %v657 = vld [vmem:[#allocation9 + $0x48] sm:$0xff]
    %v658 = vld [vmem:[#allocation9 + $0x50] sm:$0xff]
    %v659 = vld [vmem:[#allocation9 + $0x58] sm:$0xff]
    %v660 = vld [vmem:[#allocation9 + $0x60] sm:$0xff]
    %v661 = vld [vmem:[#allocation9 + $0x68] sm:$0xff]
    %v662 = vld [vmem:[#allocation9 + $0x70] sm:$0xff]
    %v663 = vld [vmem:[#allocation9 + $0x78] sm:$0xff]
    %664 = vmatprep.subr.mxu0 0.0
    %665 = vmatpush1.msra.mxu0 %v663
    %666 = vmatprep.subr.mxu0 0.0
    %667 = vmatpush1.msra.mxu0 %v662
    %668 = vmatprep.subr.mxu0 0.0
    %669 = vmatpush1.msra.mxu0 %v661
    %670 = vmatprep.subr.mxu0 0.0
    %671 = vmatpush1.msra.mxu0 %v660
    %672 = vmatprep.subr.mxu0 0.0
    %673 = vmatpush1.msra.mxu0 %v659
    %674 = vmatprep.subr.mxu0 0.0
    %675 = vmatpush1.msra.mxu0 %v658
    %676 = vmatprep.subr.mxu0 0.0
    %677 = vmatpush1.msra.mxu0 %v657
    %678 = vmatprep.subr.mxu0 0.0
    %679 = vmatpush1.msra.mxu0 %v656
    %680 = vmatprep.subr.mxu0 0.0
    %681 = vmatpush1.msra.mxu0 %v655
    %682 = vmatprep.subr.mxu0 0.0
    %683 = vmatpush1.msra.mxu0 %v654
    %684 = vmatprep.subr.mxu0 0.0
    %685 = vmatpush1.msra.mxu0 %v653
    %686 = vmatprep.subr.mxu0 0.0
    %687 = vmatpush1.msra.mxu0 %v652
    %688 = vmatprep.subr.mxu0 0.0
    %689 = vmatpush1.msra.mxu0 %v651
    %690 = vmatprep.subr.mxu0 0.0
    %691 = vmatpush1.msra.mxu0 %v650
    %692 = vmatprep.subr.mxu0 0.0
    %693 = vmatpush1.msra.mxu0 %v649
    %694 = vmatprep.subr.mxu0 0.0
    %695 = vmatpush1.msra.mxu0 %v648
    %696 = vmatprep.subr.mxu0 0.0
    %697 = vmatpush2.msra.mxu0 0.0
    %698 = vmatprep.subr.mxu0 0.0
    %699 = vmatpush2.msra.mxu0 0.0
    %700 = vmatprep.subr.mxu0 0.0
    %701 = vmatpush2.msra.mxu0 0.0
    %702 = vmatprep.subr.mxu0 0.0
    %703 = vmatpush2.msra.mxu0 0.0
    %704 = vmatprep.subr.mxu0 0.0
    %705 = vmatpush2.msra.mxu0 0.0
    %706 = vmatprep.subr.mxu0 0.0
    %707 = vmatpush2.msra.mxu0 0.0
    %708 = vmatprep.subr.mxu0 0.0
    %709 = vmatpush2.msra.mxu0 0.0
    %710 = vmatprep.subr.mxu0 0.0
    %711 = vmatpush2.msra.mxu0 0.0
    %712 = vmatprep.subr.mxu0 0.0
    %713 = vmatpush2.msra.mxu0 0.0
    %714 = vmatprep.subr.mxu0 0.0
    %715 = vmatpush2.msra.mxu0 0.0
    %716 = vmatprep.subr.mxu0 0.0
    %717 = vmatpush2.msra.mxu0 0.0
    %718 = vmatprep.subr.mxu0 0.0
    %719 = vmatpush2.msra.mxu0 0.0
    %720 = vmatprep.subr.mxu0 0.0
    %721 = vmatpush2.msra.mxu0 0.0
    %722 = vmatprep.subr.mxu0 0.0
    %723 = vmatpush2.msra.mxu0 0.0
    %724 = vmatprep.subr.mxu0 0.0
    %725 = vmatpush2.msra.mxu0 0.0
    %726 = vmatprep.subr.mxu0 0.0
    %727 = vmatpush2.msra.mxu0 0.0
    %728 = vmatprep.mubr.f32.mxu0 0.0
    %729 = vmatmul.mubr.f32.gmra.mxu0 %v645
    %v730 = vpop.f32.mrf.mxu0
    %v731 = vadd.f32 0.0, %v730
    %v732 = vpop.f32.mrf.mxu0
    %733 = vdwg.mxu0
    %v734 = vadd.f32 %v647, %v731
    %v735 = vtanh.pop %v734
    %736 = vst [vmem:[#allocation2] sm:$0xff] %v735
    %s737 = scalar_lea.vmem [#allocation3], 48
    %738 = vst [vmem:[%s737] sm:$0xff] %v735
    %v739 = vld [vmem:[#allocation2] sm:$0xff]
    %s740 = scalar_lea.vmem [#allocation4], 56
    %v741 = vld [vmem:[%s740] sm:$0xff]
    %v742 = vld [vmem:[#allocation9] sm:$0xff]
    %v743 = vld [vmem:[#allocation9 + $0x8] sm:$0xff]
    %v744 = vld [vmem:[#allocation9 + $0x10] sm:$0xff]
    %v745 = vld [vmem:[#allocation9 + $0x18] sm:$0xff]
    %v746 = vld [vmem:[#allocation9 + $0x20] sm:$0xff]
    %v747 = vld [vmem:[#allocation9 + $0x28] sm:$0xff]
    %v748 = vld [vmem:[#allocation9 + $0x30] sm:$0xff]
    %v749 = vld [vmem:[#allocation9 + $0x38] sm:$0xff]
    %v750 = vld [vmem:[#allocation9 + $0x40] sm:$0xff]
    %v751 = vld [vmem:[#allocation9 + $0x48] sm:$0xff]
    %v752 = vld [vmem:[#allocation9 + $0x50] sm:$0xff]
    %v753 = vld [vmem:[#allocation9 + $0x58] sm:$0xff]
    %v754 = vld [vmem:[#allocation9 + $0x60] sm:$0xff]
    %v755 = vld [vmem:[#allocation9 + $0x68] sm:$0xff]
    %v756 = vld [vmem:[#allocation9 + $0x70] sm:$0xff]
    %v757 = vld [vmem:[#allocation9 + $0x78] sm:$0xff]
    %758 = vmatprep.subr.mxu0 0.0
    %759 = vmatpush1.msra.mxu0 %v757
    %760 = vmatprep.subr.mxu0 0.0
    %761 = vmatpush1.msra.mxu0 %v756
    %762 = vmatprep.subr.mxu0 0.0
    %763 = vmatpush1.msra.mxu0 %v755
    %764 = vmatprep.subr.mxu0 0.0
    %765 = vmatpush1.msra.mxu0 %v754
    %766 = vmatprep.subr.mxu0 0.0
    %767 = vmatpush1.msra.mxu0 %v753
    %768 = vmatprep.subr.mxu0 0.0
    %769 = vmatpush1.msra.mxu0 %v752
    %770 = vmatprep.subr.mxu0 0.0
    %771 = vmatpush1.msra.mxu0 %v751
    %772 = vmatprep.subr.mxu0 0.0
    %773 = vmatpush1.msra.mxu0 %v750
    %774 = vmatprep.subr.mxu0 0.0
    %775 = vmatpush1.msra.mxu0 %v749
    %776 = vmatprep.subr.mxu0 0.0
    %777 = vmatpush1.msra.mxu0 %v748
    %778 = vmatprep.subr.mxu0 0.0
    %779 = vmatpush1.msra.mxu0 %v747
    %780 = vmatprep.subr.mxu0 0.0
    %781 = vmatpush1.msra.mxu0 %v746
    %782 = vmatprep.subr.mxu0 0.0
    %783 = vmatpush1.msra.mxu0 %v745
    %784 = vmatprep.subr.mxu0 0.0
    %785 = vmatpush1.msra.mxu0 %v744
    %786 = vmatprep.subr.mxu0 0.0
    %787 = vmatpush1.msra.mxu0 %v743
    %788 = vmatprep.subr.mxu0 0.0
    %789 = vmatpush1.msra.mxu0 %v742
    %790 = vmatprep.subr.mxu0 0.0
    %791 = vmatpush2.msra.mxu0 0.0
    %792 = vmatprep.subr.mxu0 0.0
    %793 = vmatpush2.msra.mxu0 0.0
    %794 = vmatprep.subr.mxu0 0.0
    %795 = vmatpush2.msra.mxu0 0.0
    %796 = vmatprep.subr.mxu0 0.0
    %797 = vmatpush2.msra.mxu0 0.0
    %798 = vmatprep.subr.mxu0 0.0
    %799 = vmatpush2.msra.mxu0 0.0
    %800 = vmatprep.subr.mxu0 0.0
    %801 = vmatpush2.msra.mxu0 0.0
    %802 = vmatprep.subr.mxu0 0.0
    %803 = vmatpush2.msra.mxu0 0.0
    %804 = vmatprep.subr.mxu0 0.0
    %805 = vmatpush2.msra.mxu0 0.0
    %806 = vmatprep.subr.mxu0 0.0
    %807 = vmatpush2.msra.mxu0 0.0
    %808 = vmatprep.subr.mxu0 0.0
    %809 = vmatpush2.msra.mxu0 0.0
    %810 = vmatprep.subr.mxu0 0.0
    %811 = vmatpush2.msra.mxu0 0.0
    %812 = vmatprep.subr.mxu0 0.0
    %813 = vmatpush2.msra.mxu0 0.0
    %814 = vmatprep.subr.mxu0 0.0
    %815 = vmatpush2.msra.mxu0 0.0
    %816 = vmatprep.subr.mxu0 0.0
    %817 = vmatpush2.msra.mxu0 0.0
    %818 = vmatprep.subr.mxu0 0.0
    %819 = vmatpush2.msra.mxu0 0.0
    %820 = vmatprep.subr.mxu0 0.0
    %821 = vmatpush2.msra.mxu0 0.0
    %822 = vmatprep.mubr.f32.mxu0 0.0
    %823 = vmatmul.mubr.f32.gmra.mxu0 %v739
    %v824 = vpop.f32.mrf.mxu0
    %v825 = vadd.f32 0.0, %v824
    %v826 = vpop.f32.mrf.mxu0
    %827 = vdwg.mxu0
    %v828 = vadd.f32 %v741, %v825
    %v829 = vtanh.pop %v828
    %830 = vst [vmem:[#allocation2] sm:$0xff] %v829
    %s831 = scalar_lea.vmem [#allocation3], 56
    %832 = vst [vmem:[%s831] sm:$0xff] %v829
    %v833 = vld [vmem:[#allocation3] sm:$0xff]
    %v834 = vld [vmem:[#allocation3 + $0x8] sm:$0xff]
    %v835 = vld [vmem:[#allocation3 + $0x10] sm:$0xff]
    %v836 = vld [vmem:[#allocation3 + $0x18] sm:$0xff]
    %v837 = vld [vmem:[#allocation3 + $0x20] sm:$0xff]
    %v838 = vld [vmem:[#allocation3 + $0x28] sm:$0xff]
    %v839 = vld [vmem:[#allocation3 + $0x30] sm:$0xff]
    %v840 = vld [vmem:[#allocation3 + $0x38] sm:$0xff]
    %v841 = vld [vmem:[#allocation10] sm:$0xff]
    %v842 = vld [vmem:[#allocation10 + $0x8] sm:$0xff]
    %v843 = vld [vmem:[#allocation10 + $0x10] sm:$0xff]
    %v844 = vld [vmem:[#allocation10 + $0x18] sm:$0xff]
    %v845 = vld [vmem:[#allocation10 + $0x20] sm:$0xff]
    %v846 = vld [vmem:[#allocation10 + $0x28] sm:$0xff]
    %v847 = vld [vmem:[#allocation10 + $0x30] sm:$0xff]
    %v848 = vld [vmem:[#allocation10 + $0x38] sm:$0xff]
    %v849 = vld [vmem:[#allocation10 + $0x40] sm:$0xff]
    %v850 = vld [vmem:[#allocation10 + $0x48] sm:$0xff]
    %v851 = vld [vmem:[#allocation10 + $0x50] sm:$0xff]
    %v852 = vld [vmem:[#allocation10 + $0x58] sm:$0xff]
    %v853 = vld [vmem:[#allocation10 + $0x60] sm:$0xff]
    %v854 = vld [vmem:[#allocation10 + $0x68] sm:$0xff]
    %v855 = vld [vmem:[#allocation10 + $0x70] sm:$0xff]
    %v856 = vld [vmem:[#allocation10 + $0x78] sm:$0xff]
    %v857 = vld [vmem:[%s4] sm:$0x1]
    %v859 = vlaneseq
    %v860 = vshrl.u32 %v859, 7
    %v861 = vsub.s32 0, %v860
    %v862 = vrot.slane %v857, %v861
    %864 = vmatprep.subr.mxu0 0.0
    %865 = vmatpush1.msra.mxu0 %v856
    %866 = vmatprep.subr.mxu0 0.0
    %867 = vmatpush1.msra.mxu0 %v855
    %868 = vmatprep.subr.mxu0 0.0
    %869 = vmatpush1.msra.mxu0 %v854
    %870 = vmatprep.subr.mxu0 0.0
    %871 = vmatpush1.msra.mxu0 %v853
    %872 = vmatprep.subr.mxu0 0.0
    %873 = vmatpush1.msra.mxu0 %v852
    %874 = vmatprep.subr.mxu0 0.0
    %875 = vmatpush1.msra.mxu0 %v851
    %876 = vmatprep.subr.mxu0 0.0
    %877 = vmatpush1.msra.mxu0 %v850
    %878 = vmatprep.subr.mxu0 0.0
    %879 = vmatpush1.msra.mxu0 %v849
    %880 = vmatprep.subr.mxu0 0.0
    %881 = vmatpush1.msra.mxu0 %v848
    %882 = vmatprep.subr.mxu0 0.0
    %883 = vmatpush1.msra.mxu0 %v847
    %884 = vmatprep.subr.mxu0 0.0
    %885 = vmatpush1.msra.mxu0 %v846
    %886 = vmatprep.subr.mxu0 0.0
    %887 = vmatpush1.msra.mxu0 %v845
    %888 = vmatprep.subr.mxu0 0.0
    %889 = vmatpush1.msra.mxu0 %v844
    %890 = vmatprep.subr.mxu0 0.0
    %891 = vmatpush1.msra.mxu0 %v843
    %892 = vmatprep.subr.mxu0 0.0
    %893 = vmatpush1.msra.mxu0 %v842
    %894 = vmatprep.subr.mxu0 0.0
    %895 = vmatpush1.msra.mxu0 %v841
    %896 = vmatprep.subr.mxu0 0.0
    %897 = vmatpush2.msra.mxu0 0.0
    %898 = vmatprep.subr.mxu0 0.0
    %899 = vmatpush2.msra.mxu0 0.0
    %900 = vmatprep.subr.mxu0 0.0
    %901 = vmatpush2.msra.mxu0 0.0
    %902 = vmatprep.subr.mxu0 0.0
    %903 = vmatpush2.msra.mxu0 0.0
    %904 = vmatprep.subr.mxu0 0.0
    %905 = vmatpush2.msra.mxu0 0.0
    %906 = vmatprep.subr.mxu0 0.0
    %907 = vmatpush2.msra.mxu0 0.0
    %908 = vmatprep.subr.mxu0 0.0
    %909 = vmatpush2.msra.mxu0 0.0
    %910 = vmatprep.subr.mxu0 0.0
    %911 = vmatpush2.msra.mxu0 0.0
    %912 = vmatprep.subr.mxu0 0.0
    %913 = vmatpush2.msra.mxu0 0.0
    %914 = vmatprep.subr.mxu0 0.0
    %915 = vmatpush2.msra.mxu0 0.0
    %916 = vmatprep.subr.mxu0 0.0
    %917 = vmatpush2.msra.mxu0 0.0
    %918 = vmatprep.subr.mxu0 0.0
    %919 = vmatpush2.msra.mxu0 0.0
    %920 = vmatprep.subr.mxu0 0.0
    %921 = vmatpush2.msra.mxu0 0.0
    %922 = vmatprep.subr.mxu0 0.0
    %923 = vmatpush2.msra.mxu0 0.0
    %924 = vmatprep.subr.mxu0 0.0
    %925 = vmatpush2.msra.mxu0 0.0
    %926 = vmatprep.subr.mxu0 0.0
    %927 = vmatpush2.msra.mxu0 0.0
    %928 = vmatprep.mubr.f32.mxu0 0.0
    %929 = vmatmul.mubr.f32.gmra.mxu0 %v833
    %v930 = vpop.f32.mrf.mxu0
    %v931 = vadd.f32 %v862, %v930
    %v932 = vpop.f32.mrf.mxu0
    %933 = vmatprep.mubr.f32.mxu0 0.0
    %934 = vmatmul.mubr.f32.gmra.mxu0 %v834
    %v935 = vpop.f32.mrf.mxu0
    %v936 = vadd.f32 %v862, %v935
    %v937 = vpop.f32.mrf.mxu0
    %938 = vmatprep.mubr.f32.mxu0 0.0
    %939 = vmatmul.mubr.f32.gmra.mxu0 %v835
    %v940 = vpop.f32.mrf.mxu0
    %v941 = vadd.f32 %v862, %v940
    %v942 = vpop.f32.mrf.mxu0
    %943 = vmatprep.mubr.f32.mxu0 0.0
    %944 = vmatmul.mubr.f32.gmra.mxu0 %v836
    %v945 = vpop.f32.mrf.mxu0
    %v946 = vadd.f32 %v862, %v945
    %v947 = vpop.f32.mrf.mxu0
    %948 = vmatprep.mubr.f32.mxu0 0.0
    %949 = vmatmul.mubr.f32.gmra.mxu0 %v837
    %v950 = vpop.f32.mrf.mxu0
    %v951 = vadd.f32 %v862, %v950
    %v952 = vpop.f32.mrf.mxu0
    %953 = vmatprep.mubr.f32.mxu0 0.0
    %954 = vmatmul.mubr.f32.gmra.mxu0 %v838
    %v955 = vpop.f32.mrf.mxu0
    %v956 = vadd.f32 %v862, %v955
    %v957 = vpop.f32.mrf.mxu0
    %958 = vmatprep.mubr.f32.mxu0 0.0
    %959 = vmatmul.mubr.f32.gmra.mxu0 %v839
    %v960 = vpop.f32.mrf.mxu0
    %v961 = vadd.f32 %v862, %v960
    %v962 = vpop.f32.mrf.mxu0
    %963 = vmatprep.mubr.f32.mxu0 0.0
    %964 = vmatmul.mubr.f32.gmra.mxu0 %v840
    %v965 = vpop.f32.mrf.mxu0
    %v966 = vadd.f32 %v862, %v965
    %v967 = vpop.f32.mrf.mxu0
    %968 = vdwg.mxu0
    %969 = vst [vmem:[#allocation12] sm:$0xff] %v931
    %970 = vst [vmem:[#allocation12 + $0x8] sm:$0xff] %v936
    %971 = vst [vmem:[#allocation12 + $0x10] sm:$0xff] %v941
    %972 = vst [vmem:[#allocation12 + $0x18] sm:$0xff] %v946
    %973 = vst [vmem:[#allocation12 + $0x20] sm:$0xff] %v951
    %974 = vst [vmem:[#allocation12 + $0x28] sm:$0xff] %v956
    %975 = vst [vmem:[#allocation12 + $0x30] sm:$0xff] %v961
    %976 = vst [vmem:[#allocation12 + $0x38] sm:$0xff] %v966
    // Predicated region
    $region42: #{tpu_custom_call.1} parent=1 // pred_check
      %p977 = pneg %p77
    $region43: #{tpu_custom_call.1} parent=1 // pred_check_branch
      %979 = sbr.rel (%p977) target = $region45
    $region44: #{tpu_custom_call.1} parent=1 // pred_region
      %v980 = vld [vmem:[#allocation2] sm:$0xff]
      %981 = vst [vmem:[#allocation13] sm:$0xff] %v980
    $region45: #{tpu_custom_call.1} parent=1 // pred_fallthru
      _
    // Predicated region
    $region46: #{tpu_custom_call.1} parent=1 // pred_check
      _
    $region47: #{tpu_custom_call.1} parent=1 // pred_check_branch
      %983 = sbr.rel (0) target = $region49
    $region48: #{tpu_custom_call.1} parent=1 // pred_region
      %s985 = ssub.s32 1024, 1024
      %986 = vsyncadd [#allocation6], %s985
      %s987 = sshll.u32 [#allocation12], 4
      %s988 = int_to_ptr.vmem [resolvable:$true] %s987
      %993 = dma.vmem_to_hbm [thread:$0]  %s988, 1024, %s5, [#allocation6], 128, 128, 8
    $region49: #{tpu_custom_call.1} parent=1 // pred_fallthru
      _
    // Predicated region
    $region50: #{tpu_custom_call.1} parent=1 // pred_check
      _
    $region51: #{tpu_custom_call.1} parent=1 // pred_check_branch
      %995 = sbr.rel (0) target = $region53
    $region52: #{tpu_custom_call.1} parent=1 // pred_region
      %s997 = ssub.s32 128, 128
      %998 = vsyncadd [#allocation14], %s997
      %s1000 = sshll.u32 [#allocation13], 4
      %s1001 = int_to_ptr.vmem [resolvable:$true] %s1000
      %1003 = dma.vmem_to_hbm [thread:$0]  %s1001, 128, %s6, [#allocation14]
    $region53: #{tpu_custom_call.1} parent=1 // pred_fallthru
      _
    // Predicated region
    $region54: #{tpu_custom_call.1} parent=1 // pred_check
      _
    $region55: #{tpu_custom_call.1} parent=1 // pred_check_branch
      %1005 = sbr.rel (0) target = $region57
    $region56: #{tpu_custom_call.1} parent=1 // pred_region
      %1006 = dma.done [#allocation6], 1024
    $region57: #{tpu_custom_call.1} parent=1 // pred_fallthru
      _
    // Predicated region
    $region58: #{tpu_custom_call.1} parent=1 // pred_check
      _
    $region59: #{tpu_custom_call.1} parent=1 // pred_check_branch
      %1008 = sbr.rel (0) target = $region61
    $region60: #{tpu_custom_call.1} parent=1 // pred_region
      %1009 = dma.done [#allocation14], 128
    $region61: #{tpu_custom_call.1} parent=1 // pred_fallthru
      _
    %1010 = vsyncpa [#allocation5], 1
    %1011 = vsyncpa [#allocation8], 1
    %1012 = vsyncpa [#allocation11], 1
    %1013 = vsyncpa [#allocation6], 1
    %1014 = vsyncpa [#allocation14], 1

</llo_original>
